<compile_context>
chip_gen: v7x
topology: tpu7x:2x2x1
jax: 0.10.0
libtpu: 0.0.40
codegen_flags: <defaults>
</compile_context>

<pallas_src>
import functools
import numpy as np
import jax
import jax.numpy as jnp
from jax.experimental import pallas as pl
from jax.experimental.pallas import tpu as pltpu


def _feblock_kernel(w2, cout, pad, packed,
                    x_ref, wd_ref, wst_ref, vec_ref, msk_ref,
                    o_ref, scr_ref):
    m, cp = o_ref.shape

    # Zero only the border rows of the shift scratch (the interior is fully rewritten by
    # every conv before any shifted read).  Never assume uninitialized VMEM is zero.
    zeros_border = jnp.zeros((pad, cp), jnp.float32)
    scr_ref[0:pad, :] = zeros_border
    scr_ref[pad + m:pad + m + pad, :] = zeros_border

    vec = vec_ref[...]                          # (16, cp) packed small operands
    bias = [vec[k:k + 1] for k in range(5)]     # b_down, b11, b12, b21, b22
    gamma, beta = vec[5:6], vec[6:7]
    slope = [vec[7 + k:8 + k] for k in range(5)]
    cmask = vec[12:13]                          # 1.0 for real channels, 0.0 for padding

    def prelu(y, a_row):
        return jnp.where(y > 0, y, a_row * y)

    # tap order matches the packed weights: tap = dh*3 + dw, row shift (dh-1)*w2 + (dw-1)
    shifts = [(dh - 1) * w2 + (dw - 1) for dh in range(3) for dw in range(3)]

    if packed:
        # (m, cp) lane-dense validity mask, laid out tap-major x channel along lanes;
        # grid-invariant input -> DMA'd once, reused by all four convs, no broadcasts.
        kmask = msk_ref[...]

        def conv3x3(y, widx, b_row):
            # Packed-K im2col: tap t's cout channels are rolled into lanes
            # [t*cout, (t+1)*cout) (disjoint since 9*cout <= cp); the padded lanes of
            # every feature map are exactly zero, so the rolled contributions just add.
            # One (m, cp) @ (cp, cp) bf16 MXU contraction per conv, f32 accumulate.
            scr_ref[pad:pad + m, :] = y
            cols = scr_ref[pad + shifts[0]:pad + shifts[0] + m, :]
            for t in range(1, 9):
                sh = scr_ref[pad + shifts[t]:pad + shifts[t] + m, :]
                cols = cols + pltpu.roll(sh, t * cout, axis=1)
            cols = (cols * kmask).astype(jnp.bfloat16)
            return jnp.dot(cols, wst_ref[widx],
                           preferred_element_type=jnp.float32) + b_row
    else:
        # General-cout fallback: per-tap MXU accumulation (no big cols buffer).
        tmask = msk_ref[...]                    # (m, 16) per-tap 0/1 validity masks

        def conv3x3(y, widx, b_row):
            scr_ref[pad:pad + m, :] = y
            acc = jnp.dot(y.astype(jnp.bfloat16), wst_ref[widx, 4],
                          preferred_element_type=jnp.float32)   # center tap: mask == 1
            for t in (0, 1, 2, 3, 5, 6, 7, 8):
                sh = scr_ref[pad + shifts[t]:pad + shifts[t] + m, :] * tmask[:, t:t + 1]
                acc = acc + jnp.dot(sh.astype(jnp.bfloat16), wst_ref[widx, t],
                                    preferred_element_type=jnp.float32)
            return acc + b_row

    # down: 2x2/stride-2 conv (input pre space-to-depth'd -> plain matmul) + PReLU
    feat = jnp.dot(x_ref[...].astype(jnp.bfloat16), wd_ref[...],
                   preferred_element_type=jnp.float32)
    feat = prelu(feat + bias[0], slope[0])

    # ResBlock 1 (identity residual since in_ch == out_ch)
    o = prelu(conv3x3(feat, 0, bias[1]), slope[1])
    o = conv3x3(o, 1, bias[2])
    feat = prelu(o + feat, slope[2])

    # ResBlock 2
    o = prelu(conv3x3(feat, 2, bias[3]), slope[3])
    o = conv3x3(o, 3, bias[4])
    feat = prelu(o + feat, slope[4])

    # LayerNorm over the real channel axis (PyTorch biased variance, eps=1e-5).
    # Mean and variance are both masked to the real channels (padded lanes are exactly
    # zero anyway, but masking the mean keeps this robust to future changes).
    inv_c = 1.0 / cout
    mu = jnp.sum(feat * cmask, axis=-1, keepdims=True) * inv_c
    cen = feat - mu
    var = jnp.sum(jnp.square(cen) * cmask, axis=-1, keepdims=True) * inv_c
    y = cen * jax.lax.rsqrt(var + 1e-5)
    o_ref[...] = (y * gamma + beta).astype(o_ref.dtype)


def feblock_forward(x_nchw, p):
    n, cin, hh, ww = x_nchw.shape
    assert hh % 2 == 0 and ww % 2 == 0, "FEBlock 2x2/s2 down-conv needs even spatial dims"
    h2, w2 = hh // 2, ww // 2
    hw = h2 * w2
    cout = p["w_down"].shape[0]
    cp = ((cout + 127) // 128) * 128           # lane-dense padded channel width
    pad = -(-(w2 + 1) // 8) * 8                # zero border rows (>= max shift, 8-aligned)
    packed = 9 * cout <= cp                    # packed-K (roll) path fits one lane width

    # Fold batch into the matmul M dimension.  Use large tiles (amortize per-step
    # pipeline overhead) but keep >= 2 grid steps when the batch allows so both v7x
    # TensorCores get work; keep the row block a multiple of 8 sublanes.
    nb = min(n, max(1, 2048 // hw))
    if n >= 2:
        nb = min(nb, n // 2)
    nb = max(nb, 1)
    while nb > 1 and (n % nb or (nb * hw) % 8):
        nb -= 1
    if (nb * hw) % 8:
        # TODO(synk): support odd h2*w2 by padding the flattened rows to a multiple of 8.
        raise ValueError("batch-tile rows (nb * h2 * w2) must be a multiple of 8")
    m_blk = nb * hw
    # TODO(synk): for n == 1 on v7x, split one image into two row tiles with a halo region.

    # glue: NCHW -> flattened space-to-depth, channel order (kh, kw, ci)
    x = jnp.transpose(x_nchw, (0, 2, 3, 1))
    x = x.reshape(n, h2, 2, w2, 2, cin).transpose(0, 1, 3, 2, 4, 5)
    x2d = x.reshape(n * hw, 4 * cin)

    padc = lambda a: jnp.pad(a, ((0, 0),) * (a.ndim - 1) + ((0, cp - cout),))

    # down-conv weight: OIHW -> (kh,kw,ci)-major x co, channel-padded, bf16 for the MXU
    wd = padc(jnp.transpose(p["w_down"], (2, 3, 1, 0)).reshape(4 * cin, cout))
    wd = wd.astype(jnp.bfloat16)

    if packed:
        # Packed-K 3x3 weights: rows = tap*cout + ci (real channels only), K padded to cp.
        def wstack(w):
            wt = jnp.transpose(w, (2, 3, 1, 0)).reshape(9 * cout, cout)
            return jnp.pad(wt, ((0, cp - 9 * cout), (0, cp - cout)))
        wst = jnp.stack([wstack(p["w11"]), wstack(p["w12"]),
                         wstack(p["w21"]), wstack(p["w22"])], 0).astype(jnp.bfloat16)
        wst_spec = pl.BlockSpec((4, cp, cp), lambda b: (0, 0, 0))
        kdim = cp
    else:
        # General cout: per-tap (cp, cp) weights, accumulated tap by tap in the kernel.
        def wstack(w):
            wt = jnp.transpose(w, (2, 3, 1, 0)).reshape(9, cout, cout)
            return jnp.pad(wt, ((0, 0), (0, cp - cout), (0, cp - cout)))
        wst = jnp.stack([wstack(p["w11"]), wstack(p["w12"]),
                         wstack(p["w21"]), wstack(p["w22"])], 0).astype(jnp.bfloat16)
        wst_spec = pl.BlockSpec((4, 9, cp, cp), lambda b: (0, 0, 0, 0))
        kdim = 9 * cp

    # packed small operands: biases, gamma, beta, PReLU slopes, channel mask (f32)
    row = lambda v: padc(v.reshape(1, cout).astype(jnp.float32))
    srow = lambda a: jnp.full((1, cp), a, jnp.float32)
    cmask = (jnp.arange(cp) < cout).astype(jnp.float32).reshape(1, cp)
    a = p["prelu"]
    vec = jnp.concatenate(
        [row(p["b_down"]), row(p["b11"]), row(p["b12"]), row(p["b21"]), row(p["b22"]),
         row(p["gamma"]), row(p["beta"]),
         srow(a[0]), srow(a[1]), srow(a[2]), srow(a[3]), srow(a[4]),
         cmask, jnp.zeros((3, cp), jnp.float32)], axis=0)            # (16, cp)

    # Per-row tap validity masks (conv zero-padding, row wrap-around, cross-image
    # leakage), precomputed on the host (no in-kernel integer div/mod) and grid-invariant
    # (constant index_map -> DMA'd into VMEM only once).
    pix = np.arange(m_blk) % hw
    ii, jj = pix // w2, pix % w2
    if packed:
        lane = np.arange(cp)
        tap = np.minimum(lane // cout, 8)      # lanes >= 9*cout hit zero weight rows
        oh, ow = tap // 3 - 1, tap % 3 - 1
        vi = ii[:, None] + oh[None, :]
        vj = jj[:, None] + ow[None, :]
        msk = ((vi >= 0) & (vi < h2) & (vj >= 0) & (vj < w2)).astype(np.float32)
        msk_spec = pl.BlockSpec((m_blk, cp), lambda b: (0, 0))
    else:
        msk = np.zeros((m_blk, 16), np.float32)
        for dh in range(3):
            for dw in range(3):
                oh, ow = dh - 1, dw - 1
                msk[:, dh * 3 + dw] = ((ii + oh >= 0) & (ii + oh < h2) &
                                       (jj + ow >= 0) & (jj + ow < w2))
        msk_spec = pl.BlockSpec((m_blk, 16), lambda b: (0, 0))
    msk = jnp.asarray(msk)

    kernel = functools.partial(_feblock_kernel, w2, cout, pad, packed)

    # advisory cost estimate: lets XLA overlap the NCHW / space-to-depth glue transposes
    m_total = n * hw
    flops = 2 * m_total * (4 * cin * cp + 4 * kdim * cp)
    bytes_accessed = int(x2d.size * 4 + wd.size * 2 + wst.size * 2 + vec.size * 4
                         + msk.size * 4 + m_total * cp * 4)
    cost = pl.CostEstimate(flops=flops, transcendentals=0, bytes_accessed=bytes_accessed)

    # explicit VMEM budget (scoped defaults: 16 MiB v5e, 32 MiB v6e/v7x; 64 MiB physical
    # per TensorCore on v7x) -- double-buffered I/O + weights + shift scratch + margin.
    scr_bytes = (m_blk + 2 * pad) * cp * 4
    io_bytes = 2 * (m_blk * 4 * cin * 4 + m_blk * cp * 4)
    w_bytes = 2 * (wd.size * 2 + wst.size * 2 + vec.size * 4 + msk.size * 4)
    vmem_limit = int(min(64 * 1024 * 1024,
                         max(16 * 1024 * 1024, 2 * (scr_bytes + io_bytes + w_bytes))))

    out = pl.pallas_call(
        kernel,
        out_shape=jax.ShapeDtypeStruct((n * hw, cp), jnp.float32),
        grid=(n // nb,),
        in_specs=[
            pl.BlockSpec((m_blk, 4 * cin), lambda b: (b, 0)),
            pl.BlockSpec((4 * cin, cp), lambda b: (0, 0)),
            wst_spec,
            pl.BlockSpec((16, cp), lambda b: (0, 0)),
            msk_spec,
        ],
        out_specs=pl.BlockSpec((m_blk, cp), lambda b: (b, 0)),
        scratch_shapes=[pltpu.VMEM((m_blk + 2 * pad, cp), jnp.float32)],
        compiler_params=pltpu.CompilerParams(
            dimension_semantics=("parallel",),
            vmem_limit_bytes=vmem_limit),
        cost_estimate=cost,
    )(x2d, wd, wst, vec, msk)

    # glue: lane-dense padded output -> NCHW (drop padded channels)
    out = out[:, :cout].reshape(n, h2, w2, cout)
    return jnp.transpose(out, (0, 3, 1, 2))


def feblock_reference(x, p):
    """Pure-JAX (f32) replica of the PyTorch forward, used only to validate the kernel."""
    def conv(x, w, b, stride, padcfg):
        y = jax.lax.conv_general_dilated(
            x, w, (stride, stride), padcfg, dimension_numbers=("NCHW", "OIHW", "NCHW"))
        return y + b[None, :, None, None]

    def prelu(y, a):
        return jnp.where(y > 0, y, a * y)

    a = p["prelu"]
    y = prelu(conv(x, p["w_down"], p["b_down"], 2, "VALID"), a[0])

    def resblock(y, w1, b1, a1, w2, b2, a2):
        o = prelu(conv(y, w1, b1, 1, [(1, 1), (1, 1)]), a1)
        o = conv(o, w2, b2, 1, [(1, 1), (1, 1)])
        return prelu(o + y, a2)

    y = resblock(y, p["w11"], p["b11"], a[1], p["w12"], p["b12"], a[2])
    y = resblock(y, p["w21"], p["b21"], a[3], p["w22"], p["b22"], a[4])

    yt = jnp.transpose(y, (0, 2, 3, 1))
    mu = yt.mean(-1, keepdims=True)
    var = ((yt - mu) ** 2).mean(-1, keepdims=True)
    yt = (yt - mu) / jnp.sqrt(var + 1e-5) * p["gamma"] + p["beta"]
    return jnp.transpose(yt, (0, 3, 1, 2))


if __name__ == "__main__":
    n, cin, cout, hh, ww = 2, 4, 8, 16, 16

    key = jax.random.PRNGKey(0)
    ks = jax.random.split(key, 14)
    nrm = lambda k, s, sc: sc * jax.random.normal(k, s, jnp.float32)

    params = {
        "w_down": nrm(ks[0], (cout, cin, 2, 2), 0.2), "b_down": nrm(ks[1], (cout,), 0.1),
        "w11": nrm(ks[2], (cout, cout, 3, 3), 0.2),   "b11": nrm(ks[3], (cout,), 0.1),
        "w12": nrm(ks[4], (cout, cout, 3, 3), 0.2),   "b12": nrm(ks[5], (cout,), 0.1),
        "w21": nrm(ks[6], (cout, cout, 3, 3), 0.2),   "b21": nrm(ks[7], (cout,), 0.1),
        "w22": nrm(ks[8], (cout, cout, 3, 3), 0.2),   "b22": nrm(ks[9], (cout,), 0.1),
        "prelu": jnp.full((5,), 0.25, jnp.float32),   # torch nn.PReLU() default init
        "gamma": 1.0 + nrm(ks[10], (cout,), 0.1),
        "beta": nrm(ks[11], (cout,), 0.1),
    }

    x = jax.random.normal(ks[12], (n, cin, hh, ww), jnp.float32)

    out = jax.block_until_ready(feblock_forward(x, params))
    ref = jax.block_until_ready(feblock_reference(x, params))

    assert out.shape == (n, cout, hh // 2, ww // 2), out.shape
    # Tolerance loosened vs. the f32 reference because the MXU contractions now take
    # bf16 inputs (f32 accumulation), per the performance review; structural errors
    # (wrong tap/mask/weight layout) are O(1) after LayerNorm and still caught.
    np.testing.assert_allclose(np.asarray(out), np.asarray(ref), rtol=1e-1, atol=1e-1)
    print("KERNEL_OK")
</pallas_src>

<mosaic_0001>
module attributes {stable_mosaic.version = 11 : i64} {
  func.func @_feblock_kernel(%arg0: i32, %arg1: memref<64x16xf32, #tpu.memory_space<vmem>>, %arg2: memref<16x128xbf16, #tpu.memory_space<vmem>>, %arg3: memref<4x128x128xbf16, #tpu.memory_space<vmem>>, %arg4: memref<16x128xf32, #tpu.memory_space<vmem>>, %arg5: memref<64x128xf32, #tpu.memory_space<vmem>>, %arg6: memref<64x128xf32, #tpu.memory_space<vmem>>, %arg7: memref<96x128xf32, #tpu.memory_space<vmem>>) attributes {dimension_semantics = [#tpu.dimension_semantics<parallel>], iteration_bounds = array<i64: 2>, scalar_prefetch = 0 : i64, scratch_operands = 1 : i64, tpu.core_type = #tpu.core_type<tc>, window_params = [{transform_indices = @transform_0, window_bounds = array<i64: 64, 16>}, {pipeline_mode = #tpu.pipeline_mode<synchronous>, transform_indices = @transform_1, window_bounds = array<i64: 16, 128>}, {pipeline_mode = #tpu.pipeline_mode<synchronous>, transform_indices = @transform_2, window_bounds = array<i64: 4, 128, 128>}, {pipeline_mode = #tpu.pipeline_mode<synchronous>, transform_indices = @transform_3, window_bounds = array<i64: 16, 128>}, {pipeline_mode = #tpu.pipeline_mode<synchronous>, transform_indices = @transform_4, window_bounds = array<i64: 64, 128>}, {transform_indices = @transform_5, window_bounds = array<i64: 64, 128>}]} {
    %cst = arith.constant 0.000000e+00 : f32
    %0 = vector.broadcast %cst : f32 to vector<16x128xf32>
    %c0 = arith.constant 0 : index
    %c0_0 = arith.constant 0 : index
    %1 = vector.load %arg7[%c0, %c0_0] : memref<96x128xf32, #tpu.memory_space<vmem>>, vector<16x128xf32>
    tpu.vector_store %arg7[%c0, %c0_0], %0 {strides = array<i32>} : memref<96x128xf32, #tpu.memory_space<vmem>>, vector<16x128xf32>,
    %c80 = arith.constant 80 : index
    %c0_1 = arith.constant 0 : index
    %2 = vector.load %arg7[%c80, %c0_1] : memref<96x128xf32, #tpu.memory_space<vmem>>, vector<16x128xf32>
    tpu.vector_store %arg7[%c80, %c0_1], %0 {strides = array<i32>} : memref<96x128xf32, #tpu.memory_space<vmem>>, vector<16x128xf32>,
    %c0_2 = arith.constant 0 : index
    %c0_3 = arith.constant 0 : index
    %3 = vector.load %arg4[%c0_2, %c0_3] : memref<16x128xf32, #tpu.memory_space<vmem>>, vector<16x128xf32>
    %4 = vector.extract_strided_slice %3 {offsets = [0, 0], sizes = [1, 128], strides = [1, 1]} : vector<16x128xf32> to vector<1x128xf32>
    %5 = vector.extract_strided_slice %3 {offsets = [1, 0], sizes = [1, 128], strides = [1, 1]} : vector<16x128xf32> to vector<1x128xf32>
    %6 = vector.extract_strided_slice %3 {offsets = [2, 0], sizes = [1, 128], strides = [1, 1]} : vector<16x128xf32> to vector<1x128xf32>
    %7 = vector.extract_strided_slice %3 {offsets = [3, 0], sizes = [1, 128], strides = [1, 1]} : vector<16x128xf32> to vector<1x128xf32>
    %8 = vector.extract_strided_slice %3 {offsets = [4, 0], sizes = [1, 128], strides = [1, 1]} : vector<16x128xf32> to vector<1x128xf32>
    %9 = vector.extract_strided_slice %3 {offsets = [5, 0], sizes = [1, 128], strides = [1, 1]} : vector<16x128xf32> to vector<1x128xf32>
    %10 = vector.extract_strided_slice %3 {offsets = [6, 0], sizes = [1, 128], strides = [1, 1]} : vector<16x128xf32> to vector<1x128xf32>
    %11 = vector.extract_strided_slice %3 {offsets = [7, 0], sizes = [1, 128], strides = [1, 1]} : vector<16x128xf32> to vector<1x128xf32>
    %12 = vector.extract_strided_slice %3 {offsets = [8, 0], sizes = [1, 128], strides = [1, 1]} : vector<16x128xf32> to vector<1x128xf32>
    %13 = vector.extract_strided_slice %3 {offsets = [9, 0], sizes = [1, 128], strides = [1, 1]} : vector<16x128xf32> to vector<1x128xf32>
    %14 = vector.extract_strided_slice %3 {offsets = [10, 0], sizes = [1, 128], strides = [1, 1]} : vector<16x128xf32> to vector<1x128xf32>
    %15 = vector.extract_strided_slice %3 {offsets = [11, 0], sizes = [1, 128], strides = [1, 1]} : vector<16x128xf32> to vector<1x128xf32>
    %16 = vector.extract_strided_slice %3 {offsets = [12, 0], sizes = [1, 128], strides = [1, 1]} : vector<16x128xf32> to vector<1x128xf32>
    %c0_4 = arith.constant 0 : index
    %c0_5 = arith.constant 0 : index
    %17 = vector.load %arg5[%c0_4, %c0_5] : memref<64x128xf32, #tpu.memory_space<vmem>>, vector<64x128xf32>
    %c0_6 = arith.constant 0 : index
    %c0_7 = arith.constant 0 : index
    %18 = vector.load %arg1[%c0_6, %c0_7] : memref<64x16xf32, #tpu.memory_space<vmem>>, vector<64x16xf32>
    %19 = arith.truncf %18 : vector<64x16xf32> to vector<64x16xbf16>
    %c0_8 = arith.constant 0 : index
    %c0_9 = arith.constant 0 : index
    %20 = vector.load %arg2[%c0_8, %c0_9] : memref<16x128xbf16, #tpu.memory_space<vmem>>, vector<16x128xbf16>
    %cst_10 = arith.constant dense<0.000000e+00> : vector<64x128xf32>
    %21 = tpu.matmul %19, %20, %cst_10 {dimension_numbers = #tpu.dot_dimension_numbers<[1], [0], [0], [1], [0, 0, 1, 1], [], []>} : vector<64x16xbf16>, vector<16x128xbf16>, vector<64x128xf32> -> vector<64x128xf32>
    %22 = vector.broadcast %4 : vector<1x128xf32> to vector<64x128xf32>
    %23 = arith.addf %21, %22 : vector<64x128xf32>
    %cst_11 = arith.constant 0.000000e+00 : f32
    %24 = vector.broadcast %cst_11 : f32 to vector<64x128xf32>
    %25 = arith.cmpf ogt, %23, %24 : vector<64x128xf32>
    %26 = vector.broadcast %11 : vector<1x128xf32> to vector<64x128xf32>
    %27 = arith.mulf %26, %23 : vector<64x128xf32>
    %28 = arith.select %25, %23, %27 : vector<64x128xi1>, vector<64x128xf32>
    %c16 = arith.constant 16 : index
    %c0_12 = arith.constant 0 : index
    %29 = vector.load %arg7[%c16, %c0_12] : memref<96x128xf32, #tpu.memory_space<vmem>>, vector<64x128xf32>
    tpu.vector_store %arg7[%c16, %c0_12], %28 {strides = array<i32>} : memref<96x128xf32, #tpu.memory_space<vmem>>, vector<64x128xf32>,
    %c7 = arith.constant 7 : index
    %c0_13 = arith.constant 0 : index
    %30 = vector.load %arg7[%c7, %c0_13] : memref<96x128xf32, #tpu.memory_space<vmem>>, vector<64x128xf32>
    %c8 = arith.constant 8 : index
    %c0_14 = arith.constant 0 : index
    %31 = vector.load %arg7[%c8, %c0_14] : memref<96x128xf32, #tpu.memory_space<vmem>>, vector<64x128xf32>
    %c8_i32 = arith.constant 8 : i32
    %32 = tpu.dynamic_rotate %31 by %c8_i32 dim 1 : vector<64x128xf32>, i32 -> vector<64x128xf32>
    %33 = arith.addf %30, %32 : vector<64x128xf32>
    %c9 = arith.constant 9 : index
    %c0_15 = arith.constant 0 : index
    %34 = vector.load %arg7[%c9, %c0_15] : memref<96x128xf32, #tpu.memory_space<vmem>>, vector<64x128xf32>
    %c16_i32 = arith.constant 16 : i32
    %35 = tpu.dynamic_rotate %34 by %c16_i32 dim 1 : vector<64x128xf32>, i32 -> vector<64x128xf32>
    %36 = arith.addf %33, %35 : vector<64x128xf32>
    %c15 = arith.constant 15 : index
    %c0_16 = arith.constant 0 : index
    %37 = vector.load %arg7[%c15, %c0_16] : memref<96x128xf32, #tpu.memory_space<vmem>>, vector<64x128xf32>
    %c24_i32 = arith.constant 24 : i32
    %38 = tpu.dynamic_rotate %37 by %c24_i32 dim 1 : vector<64x128xf32>, i32 -> vector<64x128xf32>
    %39 = arith.addf %36, %38 : vector<64x128xf32>
    %c16_17 = arith.constant 16 : index
    %c0_18 = arith.constant 0 : index
    %40 = vector.load %arg7[%c16_17, %c0_18] : memref<96x128xf32, #tpu.memory_space<vmem>>, vector<64x128xf32>
    %c32_i32 = arith.constant 32 : i32
    %41 = tpu.dynamic_rotate %40 by %c32_i32 dim 1 : vector<64x128xf32>, i32 -> vector<64x128xf32>
    %42 = arith.addf %39, %41 : vector<64x128xf32>
    %c17 = arith.constant 17 : index
    %c0_19 = arith.constant 0 : index
    %43 = vector.load %arg7[%c17, %c0_19] : memref<96x128xf32, #tpu.memory_space<vmem>>, vector<64x128xf32>
    %c40_i32 = arith.constant 40 : i32
    %44 = tpu.dynamic_rotate %43 by %c40_i32 dim 1 : vector<64x128xf32>, i32 -> vector<64x128xf32>
    %45 = arith.addf %42, %44 : vector<64x128xf32>
    %c23 = arith.constant 23 : index
    %c0_20 = arith.constant 0 : index
    %46 = vector.load %arg7[%c23, %c0_20] : memref<96x128xf32, #tpu.memory_space<vmem>>, vector<64x128xf32>
    %c48_i32 = arith.constant 48 : i32
    %47 = tpu.dynamic_rotate %46 by %c48_i32 dim 1 : vector<64x128xf32>, i32 -> vector<64x128xf32>
    %48 = arith.addf %45, %47 : vector<64x128xf32>
    %c24 = arith.constant 24 : index
    %c0_21 = arith.constant 0 : index
    %49 = vector.load %arg7[%c24, %c0_21] : memref<96x128xf32, #tpu.memory_space<vmem>>, vector<64x128xf32>
    %c56_i32 = arith.constant 56 : i32
    %50 = tpu.dynamic_rotate %49 by %c56_i32 dim 1 : vector<64x128xf32>, i32 -> vector<64x128xf32>
    %51 = arith.addf %48, %50 : vector<64x128xf32>
    %c25 = arith.constant 25 : index
    %c0_22 = arith.constant 0 : index
    %52 = vector.load %arg7[%c25, %c0_22] : memref<96x128xf32, #tpu.memory_space<vmem>>, vector<64x128xf32>
    %c64_i32 = arith.constant 64 : i32
    %53 = tpu.dynamic_rotate %52 by %c64_i32 dim 1 : vector<64x128xf32>, i32 -> vector<64x128xf32>
    %54 = arith.addf %51, %53 : vector<64x128xf32>
    %55 = arith.mulf %54, %17 : vector<64x128xf32>
    %56 = arith.truncf %55 : vector<64x128xf32> to vector<64x128xbf16>
    %c0_23 = arith.constant 0 : index
    %c0_24 = arith.constant 0 : index
    %c0_25 = arith.constant 0 : index
    %57 = vector.load %arg3[%c0_23, %c0_24, %c0_25] : memref<4x128x128xbf16, #tpu.memory_space<vmem>>, vector<1x128x128xbf16>
    %58 = vector.shape_cast %57 : vector<1x128x128xbf16> to vector<128x128xbf16>
    %cst_26 = arith.constant dense<0.000000e+00> : vector<64x128xf32>
    %59 = tpu.matmul %56, %58, %cst_26 {dimension_numbers = #tpu.dot_dimension_numbers<[1], [0], [0], [1], [0, 0, 1, 1], [], []>} : vector<64x128xbf16>, vector<128x128xbf16>, vector<64x128xf32> -> vector<64x128xf32>
    %60 = vector.broadcast %5 : vector<1x128xf32> to vector<64x128xf32>
    %61 = arith.addf %59, %60 : vector<64x128xf32>
    %cst_27 = arith.constant 0.000000e+00 : f32
    %62 = vector.broadcast %cst_27 : f32 to vector<64x128xf32>
    %63 = arith.cmpf ogt, %61, %62 : vector<64x128xf32>
    %64 = vector.broadcast %12 : vector<1x128xf32> to vector<64x128xf32>
    %65 = arith.mulf %64, %61 : vector<64x128xf32>
    %66 = arith.select %63, %61, %65 : vector<64x128xi1>, vector<64x128xf32>
    %c16_28 = arith.constant 16 : index
    %c0_29 = arith.constant 0 : index
    %67 = vector.load %arg7[%c16_28, %c0_29] : memref<96x128xf32, #tpu.memory_space<vmem>>, vector<64x128xf32>
    tpu.vector_store %arg7[%c16_28, %c0_29], %66 {strides = array<i32>} : memref<96x128xf32, #tpu.memory_space<vmem>>, vector<64x128xf32>,
    %c7_30 = arith.constant 7 : index
    %c0_31 = arith.constant 0 : index
    %68 = vector.load %arg7[%c7_30, %c0_31] : memref<96x128xf32, #tpu.memory_space<vmem>>, vector<64x128xf32>
    %c8_32 = arith.constant 8 : index
    %c0_33 = arith.constant 0 : index
    %69 = vector.load %arg7[%c8_32, %c0_33] : memref<96x128xf32, #tpu.memory_space<vmem>>, vector<64x128xf32>
    %c8_i32_34 = arith.constant 8 : i32
    %70 = tpu.dynamic_rotate %69 by %c8_i32_34 dim 1 : vector<64x128xf32>, i32 -> vector<64x128xf32>
    %71 = arith.addf %68, %70 : vector<64x128xf32>
    %c9_35 = arith.constant 9 : index
    %c0_36 = arith.constant 0 : index
    %72 = vector.load %arg7[%c9_35, %c0_36] : memref<96x128xf32, #tpu.memory_space<vmem>>, vector<64x128xf32>
    %c16_i32_37 = arith.constant 16 : i32
    %73 = tpu.dynamic_rotate %72 by %c16_i32_37 dim 1 : vector<64x128xf32>, i32 -> vector<64x128xf32>
    %74 = arith.addf %71, %73 : vector<64x128xf32>
    %c15_38 = arith.constant 15 : index
    %c0_39 = arith.constant 0 : index
    %75 = vector.load %arg7[%c15_38, %c0_39] : memref<96x128xf32, #tpu.memory_space<vmem>>, vector<64x128xf32>
    %c24_i32_40 = arith.constant 24 : i32
    %76 = tpu.dynamic_rotate %75 by %c24_i32_40 dim 1 : vector<64x128xf32>, i32 -> vector<64x128xf32>
    %77 = arith.addf %74, %76 : vector<64x128xf32>
    %c16_41 = arith.constant 16 : index
    %c0_42 = arith.constant 0 : index
    %78 = vector.load %arg7[%c16_41, %c0_42] : memref<96x128xf32, #tpu.memory_space<vmem>>, vector<64x128xf32>
    %c32_i32_43 = arith.constant 32 : i32
    %79 = tpu.dynamic_rotate %78 by %c32_i32_43 dim 1 : vector<64x128xf32>, i32 -> vector<64x128xf32>
    %80 = arith.addf %77, %79 : vector<64x128xf32>
    %c17_44 = arith.constant 17 : index
    %c0_45 = arith.constant 0 : index
    %81 = vector.load %arg7[%c17_44, %c0_45] : memref<96x128xf32, #tpu.memory_space<vmem>>, vector<64x128xf32>
    %c40_i32_46 = arith.constant 40 : i32
    %82 = tpu.dynamic_rotate %81 by %c40_i32_46 dim 1 : vector<64x128xf32>, i32 -> vector<64x128xf32>
    %83 = arith.addf %80, %82 : vector<64x128xf32>
    %c23_47 = arith.constant 23 : index
    %c0_48 = arith.constant 0 : index
    %84 = vector.load %arg7[%c23_47, %c0_48] : memref<96x128xf32, #tpu.memory_space<vmem>>, vector<64x128xf32>
    %c48_i32_49 = arith.constant 48 : i32
    %85 = tpu.dynamic_rotate %84 by %c48_i32_49 dim 1 : vector<64x128xf32>, i32 -> vector<64x128xf32>
    %86 = arith.addf %83, %85 : vector<64x128xf32>
    %c24_50 = arith.constant 24 : index
    %c0_51 = arith.constant 0 : index
    %87 = vector.load %arg7[%c24_50, %c0_51] : memref<96x128xf32, #tpu.memory_space<vmem>>, vector<64x128xf32>
    %c56_i32_52 = arith.constant 56 : i32
    %88 = tpu.dynamic_rotate %87 by %c56_i32_52 dim 1 : vector<64x128xf32>, i32 -> vector<64x128xf32>
    %89 = arith.addf %86, %88 : vector<64x128xf32>
    %c25_53 = arith.constant 25 : index
    %c0_54 = arith.constant 0 : index
    %90 = vector.load %arg7[%c25_53, %c0_54] : memref<96x128xf32, #tpu.memory_space<vmem>>, vector<64x128xf32>
    %c64_i32_55 = arith.constant 64 : i32
    %91 = tpu.dynamic_rotate %90 by %c64_i32_55 dim 1 : vector<64x128xf32>, i32 -> vector<64x128xf32>
    %92 = arith.addf %89, %91 : vector<64x128xf32>
    %93 = arith.mulf %92, %17 : vector<64x128xf32>
    %94 = arith.truncf %93 : vector<64x128xf32> to vector<64x128xbf16>
    %c1 = arith.constant 1 : index
    %c0_56 = arith.constant 0 : index
    %c0_57 = arith.constant 0 : index
    %95 = vector.load %arg3[%c1, %c0_56, %c0_57] : memref<4x128x128xbf16, #tpu.memory_space<vmem>>, vector<1x128x128xbf16>
    %96 = vector.shape_cast %95 : vector<1x128x128xbf16> to vector<128x128xbf16>
    %cst_58 = arith.constant dense<0.000000e+00> : vector<64x128xf32>
    %97 = tpu.matmul %94, %96, %cst_58 {dimension_numbers = #tpu.dot_dimension_numbers<[1], [0], [0], [1], [0, 0, 1, 1], [], []>} : vector<64x128xbf16>, vector<128x128xbf16>, vector<64x128xf32> -> vector<64x128xf32>
    %98 = vector.broadcast %6 : vector<1x128xf32> to vector<64x128xf32>
    %99 = arith.addf %97, %98 : vector<64x128xf32>
    %100 = arith.addf %99, %28 : vector<64x128xf32>
    %cst_59 = arith.constant 0.000000e+00 : f32
    %101 = vector.broadcast %cst_59 : f32 to vector<64x128xf32>
    %102 = arith.cmpf ogt, %100, %101 : vector<64x128xf32>
    %103 = vector.broadcast %13 : vector<1x128xf32> to vector<64x128xf32>
    %104 = arith.mulf %103, %100 : vector<64x128xf32>
    %105 = arith.select %102, %100, %104 : vector<64x128xi1>, vector<64x128xf32>
    %c16_60 = arith.constant 16 : index
    %c0_61 = arith.constant 0 : index
    %106 = vector.load %arg7[%c16_60, %c0_61] : memref<96x128xf32, #tpu.memory_space<vmem>>, vector<64x128xf32>
    tpu.vector_store %arg7[%c16_60, %c0_61], %105 {strides = array<i32>} : memref<96x128xf32, #tpu.memory_space<vmem>>, vector<64x128xf32>,
    %c7_62 = arith.constant 7 : index
    %c0_63 = arith.constant 0 : index
    %107 = vector.load %arg7[%c7_62, %c0_63] : memref<96x128xf32, #tpu.memory_space<vmem>>, vector<64x128xf32>
    %c8_64 = arith.constant 8 : index
    %c0_65 = arith.constant 0 : index
    %108 = vector.load %arg7[%c8_64, %c0_65] : memref<96x128xf32, #tpu.memory_space<vmem>>, vector<64x128xf32>
    %c8_i32_66 = arith.constant 8 : i32
    %109 = tpu.dynamic_rotate %108 by %c8_i32_66 dim 1 : vector<64x128xf32>, i32 -> vector<64x128xf32>
    %110 = arith.addf %107, %109 : vector<64x128xf32>
    %c9_67 = arith.constant 9 : index
    %c0_68 = arith.constant 0 : index
    %111 = vector.load %arg7[%c9_67, %c0_68] : memref<96x128xf32, #tpu.memory_space<vmem>>, vector<64x128xf32>
    %c16_i32_69 = arith.constant 16 : i32
    %112 = tpu.dynamic_rotate %111 by %c16_i32_69 dim 1 : vector<64x128xf32>, i32 -> vector<64x128xf32>
    %113 = arith.addf %110, %112 : vector<64x128xf32>
    %c15_70 = arith.constant 15 : index
    %c0_71 = arith.constant 0 : index
    %114 = vector.load %arg7[%c15_70, %c0_71] : memref<96x128xf32, #tpu.memory_space<vmem>>, vector<64x128xf32>
    %c24_i32_72 = arith.constant 24 : i32
    %115 = tpu.dynamic_rotate %114 by %c24_i32_72 dim 1 : vector<64x128xf32>, i32 -> vector<64x128xf32>
    %116 = arith.addf %113, %115 : vector<64x128xf32>
    %c16_73 = arith.constant 16 : index
    %c0_74 = arith.constant 0 : index
    %117 = vector.load %arg7[%c16_73, %c0_74] : memref<96x128xf32, #tpu.memory_space<vmem>>, vector<64x128xf32>
    %c32_i32_75 = arith.constant 32 : i32
    %118 = tpu.dynamic_rotate %117 by %c32_i32_75 dim 1 : vector<64x128xf32>, i32 -> vector<64x128xf32>
    %119 = arith.addf %116, %118 : vector<64x128xf32>
    %c17_76 = arith.constant 17 : index
    %c0_77 = arith.constant 0 : index
    %120 = vector.load %arg7[%c17_76, %c0_77] : memref<96x128xf32, #tpu.memory_space<vmem>>, vector<64x128xf32>
    %c40_i32_78 = arith.constant 40 : i32
    %121 = tpu.dynamic_rotate %120 by %c40_i32_78 dim 1 : vector<64x128xf32>, i32 -> vector<64x128xf32>
    %122 = arith.addf %119, %121 : vector<64x128xf32>
    %c23_79 = arith.constant 23 : index
    %c0_80 = arith.constant 0 : index
    %123 = vector.load %arg7[%c23_79, %c0_80] : memref<96x128xf32, #tpu.memory_space<vmem>>, vector<64x128xf32>
    %c48_i32_81 = arith.constant 48 : i32
    %124 = tpu.dynamic_rotate %123 by %c48_i32_81 dim 1 : vector<64x128xf32>, i32 -> vector<64x128xf32>
    %125 = arith.addf %122, %124 : vector<64x128xf32>
    %c24_82 = arith.constant 24 : index
    %c0_83 = arith.constant 0 : index
    %126 = vector.load %arg7[%c24_82, %c0_83] : memref<96x128xf32, #tpu.memory_space<vmem>>, vector<64x128xf32>
    %c56_i32_84 = arith.constant 56 : i32
    %127 = tpu.dynamic_rotate %126 by %c56_i32_84 dim 1 : vector<64x128xf32>, i32 -> vector<64x128xf32>
    %128 = arith.addf %125, %127 : vector<64x128xf32>
    %c25_85 = arith.constant 25 : index
    %c0_86 = arith.constant 0 : index
    %129 = vector.load %arg7[%c25_85, %c0_86] : memref<96x128xf32, #tpu.memory_space<vmem>>, vector<64x128xf32>
    %c64_i32_87 = arith.constant 64 : i32
    %130 = tpu.dynamic_rotate %129 by %c64_i32_87 dim 1 : vector<64x128xf32>, i32 -> vector<64x128xf32>
    %131 = arith.addf %128, %130 : vector<64x128xf32>
    %132 = arith.mulf %131, %17 : vector<64x128xf32>
    %133 = arith.truncf %132 : vector<64x128xf32> to vector<64x128xbf16>
    %c2 = arith.constant 2 : index
    %c0_88 = arith.constant 0 : index
    %c0_89 = arith.constant 0 : index
    %134 = vector.load %arg3[%c2, %c0_88, %c0_89] : memref<4x128x128xbf16, #tpu.memory_space<vmem>>, vector<1x128x128xbf16>
    %135 = vector.shape_cast %134 : vector<1x128x128xbf16> to vector<128x128xbf16>
    %cst_90 = arith.constant dense<0.000000e+00> : vector<64x128xf32>
    %136 = tpu.matmul %133, %135, %cst_90 {dimension_numbers = #tpu.dot_dimension_numbers<[1], [0], [0], [1], [0, 0, 1, 1], [], []>} : vector<64x128xbf16>, vector<128x128xbf16>, vector<64x128xf32> -> vector<64x128xf32>
    %137 = vector.broadcast %7 : vector<1x128xf32> to vector<64x128xf32>
    %138 = arith.addf %136, %137 : vector<64x128xf32>
    %cst_91 = arith.constant 0.000000e+00 : f32
    %139 = vector.broadcast %cst_91 : f32 to vector<64x128xf32>
    %140 = arith.cmpf ogt, %138, %139 : vector<64x128xf32>
    %141 = vector.broadcast %14 : vector<1x128xf32> to vector<64x128xf32>
    %142 = arith.mulf %141, %138 : vector<64x128xf32>
    %143 = arith.select %140, %138, %142 : vector<64x128xi1>, vector<64x128xf32>
    %c16_92 = arith.constant 16 : index
    %c0_93 = arith.constant 0 : index
    %144 = vector.load %arg7[%c16_92, %c0_93] : memref<96x128xf32, #tpu.memory_space<vmem>>, vector<64x128xf32>
    tpu.vector_store %arg7[%c16_92, %c0_93], %143 {strides = array<i32>} : memref<96x128xf32, #tpu.memory_space<vmem>>, vector<64x128xf32>,
    %c7_94 = arith.constant 7 : index
    %c0_95 = arith.constant 0 : index
    %145 = vector.load %arg7[%c7_94, %c0_95] : memref<96x128xf32, #tpu.memory_space<vmem>>, vector<64x128xf32>
    %c8_96 = arith.constant 8 : index
    %c0_97 = arith.constant 0 : index
    %146 = vector.load %arg7[%c8_96, %c0_97] : memref<96x128xf32, #tpu.memory_space<vmem>>, vector<64x128xf32>
    %c8_i32_98 = arith.constant 8 : i32
    %147 = tpu.dynamic_rotate %146 by %c8_i32_98 dim 1 : vector<64x128xf32>, i32 -> vector<64x128xf32>
    %148 = arith.addf %145, %147 : vector<64x128xf32>
    %c9_99 = arith.constant 9 : index
    %c0_100 = arith.constant 0 : index
    %149 = vector.load %arg7[%c9_99, %c0_100] : memref<96x128xf32, #tpu.memory_space<vmem>>, vector<64x128xf32>
    %c16_i32_101 = arith.constant 16 : i32
    %150 = tpu.dynamic_rotate %149 by %c16_i32_101 dim 1 : vector<64x128xf32>, i32 -> vector<64x128xf32>
    %151 = arith.addf %148, %150 : vector<64x128xf32>
    %c15_102 = arith.constant 15 : index
    %c0_103 = arith.constant 0 : index
    %152 = vector.load %arg7[%c15_102, %c0_103] : memref<96x128xf32, #tpu.memory_space<vmem>>, vector<64x128xf32>
    %c24_i32_104 = arith.constant 24 : i32
    %153 = tpu.dynamic_rotate %152 by %c24_i32_104 dim 1 : vector<64x128xf32>, i32 -> vector<64x128xf32>
    %154 = arith.addf %151, %153 : vector<64x128xf32>
    %c16_105 = arith.constant 16 : index
    %c0_106 = arith.constant 0 : index
    %155 = vector.load %arg7[%c16_105, %c0_106] : memref<96x128xf32, #tpu.memory_space<vmem>>, vector<64x128xf32>
    %c32_i32_107 = arith.constant 32 : i32
    %156 = tpu.dynamic_rotate %155 by %c32_i32_107 dim 1 : vector<64x128xf32>, i32 -> vector<64x128xf32>
    %157 = arith.addf %154, %156 : vector<64x128xf32>
    %c17_108 = arith.constant 17 : index
    %c0_109 = arith.constant 0 : index
    %158 = vector.load %arg7[%c17_108, %c0_109] : memref<96x128xf32, #tpu.memory_space<vmem>>, vector<64x128xf32>
    %c40_i32_110 = arith.constant 40 : i32
    %159 = tpu.dynamic_rotate %158 by %c40_i32_110 dim 1 : vector<64x128xf32>, i32 -> vector<64x128xf32>
    %160 = arith.addf %157, %159 : vector<64x128xf32>
    %c23_111 = arith.constant 23 : index
    %c0_112 = arith.constant 0 : index
    %161 = vector.load %arg7[%c23_111, %c0_112] : memref<96x128xf32, #tpu.memory_space<vmem>>, vector<64x128xf32>
    %c48_i32_113 = arith.constant 48 : i32
    %162 = tpu.dynamic_rotate %161 by %c48_i32_113 dim 1 : vector<64x128xf32>, i32 -> vector<64x128xf32>
    %163 = arith.addf %160, %162 : vector<64x128xf32>
    %c24_114 = arith.constant 24 : index
    %c0_115 = arith.constant 0 : index
    %164 = vector.load %arg7[%c24_114, %c0_115] : memref<96x128xf32, #tpu.memory_space<vmem>>, vector<64x128xf32>
    %c56_i32_116 = arith.constant 56 : i32
    %165 = tpu.dynamic_rotate %164 by %c56_i32_116 dim 1 : vector<64x128xf32>, i32 -> vector<64x128xf32>
    %166 = arith.addf %163, %165 : vector<64x128xf32>
    %c25_117 = arith.constant 25 : index
    %c0_118 = arith.constant 0 : index
    %167 = vector.load %arg7[%c25_117, %c0_118] : memref<96x128xf32, #tpu.memory_space<vmem>>, vector<64x128xf32>
    %c64_i32_119 = arith.constant 64 : i32
    %168 = tpu.dynamic_rotate %167 by %c64_i32_119 dim 1 : vector<64x128xf32>, i32 -> vector<64x128xf32>
    %169 = arith.addf %166, %168 : vector<64x128xf32>
    %170 = arith.mulf %169, %17 : vector<64x128xf32>
    %171 = arith.truncf %170 : vector<64x128xf32> to vector<64x128xbf16>
    %c3 = arith.constant 3 : index
    %c0_120 = arith.constant 0 : index
    %c0_121 = arith.constant 0 : index
    %172 = vector.load %arg3[%c3, %c0_120, %c0_121] : memref<4x128x128xbf16, #tpu.memory_space<vmem>>, vector<1x128x128xbf16>
    %173 = vector.shape_cast %172 : vector<1x128x128xbf16> to vector<128x128xbf16>
    %cst_122 = arith.constant dense<0.000000e+00> : vector<64x128xf32>
    %174 = tpu.matmul %171, %173, %cst_122 {dimension_numbers = #tpu.dot_dimension_numbers<[1], [0], [0], [1], [0, 0, 1, 1], [], []>} : vector<64x128xbf16>, vector<128x128xbf16>, vector<64x128xf32> -> vector<64x128xf32>
    %175 = vector.broadcast %8 : vector<1x128xf32> to vector<64x128xf32>
    %176 = arith.addf %174, %175 : vector<64x128xf32>
    %177 = arith.addf %176, %105 : vector<64x128xf32>
    %cst_123 = arith.constant 0.000000e+00 : f32
    %178 = vector.broadcast %cst_123 : f32 to vector<64x128xf32>
    %179 = arith.cmpf ogt, %177, %178 : vector<64x128xf32>
    %180 = vector.broadcast %15 : vector<1x128xf32> to vector<64x128xf32>
    %181 = arith.mulf %180, %177 : vector<64x128xf32>
    %182 = arith.select %179, %177, %181 : vector<64x128xi1>, vector<64x128xf32>
    %183 = vector.broadcast %16 : vector<1x128xf32> to vector<64x128xf32>
    %184 = arith.mulf %182, %183 : vector<64x128xf32>
    %cst_124 = arith.constant dense<0.000000e+00> : vector<64xf32>
    %185 = vector.multi_reduction <add>, %184, %cst_124 [1] : vector<64x128xf32> to vector<64xf32>
    %186 = vector.shape_cast %185 : vector<64xf32> to vector<64x1xf32>
    %cst_125 = arith.constant 1.250000e-01 : f32
    %187 = vector.broadcast %cst_125 : f32 to vector<64x1xf32>
    %188 = arith.mulf %186, %187 : vector<64x1xf32>
    %189 = vector.broadcast %188 : vector<64x1xf32> to vector<64x128xf32>
    %190 = arith.subf %182, %189 : vector<64x128xf32>
    %191 = arith.mulf %190, %190 : vector<64x128xf32>
    %192 = vector.broadcast %16 : vector<1x128xf32> to vector<64x128xf32>
    %193 = arith.mulf %191, %192 : vector<64x128xf32>
    %cst_126 = arith.constant dense<0.000000e+00> : vector<64xf32>
    %194 = vector.multi_reduction <add>, %193, %cst_126 [1] : vector<64x128xf32> to vector<64xf32>
    %195 = vector.shape_cast %194 : vector<64xf32> to vector<64x1xf32>
    %cst_127 = arith.constant 1.250000e-01 : f32
    %196 = vector.broadcast %cst_127 : f32 to vector<64x1xf32>
    %197 = arith.mulf %195, %196 : vector<64x1xf32>
    %cst_128 = arith.constant 9.99999974E-6 : f32
    %198 = vector.broadcast %cst_128 : f32 to vector<64x1xf32>
    %199 = arith.addf %197, %198 : vector<64x1xf32>
    %200 = math.rsqrt %199 : vector<64x1xf32>
    %201 = vector.broadcast %200 : vector<64x1xf32> to vector<64x128xf32>
    %202 = arith.mulf %190, %201 : vector<64x128xf32>
    %203 = vector.broadcast %9 : vector<1x128xf32> to vector<64x128xf32>
    %204 = arith.mulf %202, %203 : vector<64x128xf32>
    %205 = vector.broadcast %10 : vector<1x128xf32> to vector<64x128xf32>
    %206 = arith.addf %204, %205 : vector<64x128xf32>
    %c0_129 = arith.constant 0 : index
    %c0_130 = arith.constant 0 : index
    %207 = vector.load %arg6[%c0_129, %c0_130] : memref<64x128xf32, #tpu.memory_space<vmem>>, vector<64x128xf32>
    tpu.vector_store %arg6[%c0_129, %c0_130], %206 {strides = array<i32>} : memref<64x128xf32, #tpu.memory_space<vmem>>, vector<64x128xf32>,
    return
  }
  func.func @transform_0(%arg0: i32) -> (i32, i32) {
    %c0_i32 = arith.constant 0 : i32
    %c0_i32_0 = arith.constant 0 : i32
    return %arg0, %c0_i32 : i32, i32
  }
  func.func @transform_1(%arg0: i32) -> (i32, i32) {
    %c0_i32 = arith.constant 0 : i32
    %c0_i32_0 = arith.constant 0 : i32
    %c0_i32_1 = arith.constant 0 : i32
    return %c0_i32, %c0_i32_0 : i32, i32
  }
  func.func @transform_2(%arg0: i32) -> (i32, i32, i32) {
    %c0_i32 = arith.constant 0 : i32
    %c0_i32_0 = arith.constant 0 : i32
    %c0_i32_1 = arith.constant 0 : i32
    %c0_i32_2 = arith.constant 0 : i32
    return %c0_i32, %c0_i32_0, %c0_i32_1 : i32, i32, i32
  }
  func.func @transform_3(%arg0: i32) -> (i32, i32) {
    %c0_i32 = arith.constant 0 : i32
    %c0_i32_0 = arith.constant 0 : i32
    %c0_i32_1 = arith.constant 0 : i32
    return %c0_i32, %c0_i32_0 : i32, i32
  }
  func.func @transform_4(%arg0: i32) -> (i32, i32) {
    %c0_i32 = arith.constant 0 : i32
    %c0_i32_0 = arith.constant 0 : i32
    %c0_i32_1 = arith.constant 0 : i32
    return %c0_i32, %c0_i32_0 : i32, i32
  }
  func.func @transform_5(%arg0: i32) -> (i32, i32) {
    %c0_i32 = arith.constant 0 : i32
    %c0_i32_0 = arith.constant 0 : i32
    return %arg0, %c0_i32 : i32, i32
  }
}

</mosaic_0001>

<llo_original>
// kernel: tpu_custom_call.1
$region0: #{tpu_custom_call.1}
  #allocation0 [shape = 'u32[]', space=smem, size = 0x4, offset = 0x4, fixed_abs, tag = 'smem constant byte address 0x4 - core index']
  #allocation1 [shape = 'u32[144,128]{1,0:T(1,128)}', space=vmem, size = 0x12000, scoped, tag = 'internal scratch']
  #allocation2 [shape = 'f32[96,128]{1,0:T(8,128)}', space=vmem, size = 0xc000, scoped, tag = 'scratch operand']
  %s0 = inlined_call_operand.vmem [shape: f32[128,16], index: 0, kind: input, shape index: {}]
  %s1 = inlined_call_operand.vmem [shape: bf16[16,128], index: 1, kind: input, shape index: {}]
  %s2 = inlined_call_operand.hbm [shape: bf16[4,128,128], index: 2, kind: input, shape index: {}]
  %s3 = inlined_call_operand.vmem [shape: f32[16,128], index: 3, kind: input, shape index: {}]
  %s4 = inlined_call_operand.vmem [shape: f32[64,128], index: 4, kind: input, shape index: {}]
  %s5 = inlined_call_operand.hbm [shape: f32[128,128], index: 5, kind: output, shape index: {}]
  %s6 = sld [smem:[#allocation0]]
  $region57: #{tpu_custom_call.1} parent=0
    _
  %s8 = ssub.s32 1, %s6
  %s9 = scalar_select 0, %s8, %s6
  $region1: #{tpu_custom_call.1} parent=0
    #allocation3 [shape = 'u8[131072]{0}', space=vmem, size = 0x20000, scoped, tag = 'input window, operand 2, single buffered']
    #allocation4 [shape = 's32[2]{0}', space=sflag, size = 0x8, scoped, tag = 'scoped memory for tpu_custom_call.1']
    #allocation5 [shape = 's32[2]{0}', space=sflag, size = 0x8, scoped, tag = 'scoped memory for tpu_custom_call.1']
    #allocation6 [shape = 'u8[65536]{0}', space=vmem, size = 0x10000, scoped, tag = 'output window, operand 0']
    %10 = vsyncpa [#allocation4], 0
    %11 = vsyncpa [#allocation5], 0
    %s12 = scalar_lea.sflag [#allocation5], 1
    %13 = vsyncpa %s12, 0
    loop: start=0, step=1, limit=4
    $region2: #{tpu_custom_call.1} parent=1 // loop_pre_header
      _
    $region3: #{tpu_custom_call.1} parent=1 // loop_header
      %s15 = sphi 0, %s19
      %p16 = scmp.ge.s32.totalorder %s15, 4
      %s25 = sphi 0, %s27
      %s28 = sphi 0, %s25
      %s29 = sphi 0, %s28
      %s45 = sphi 0, %s29
      %s49 = sphi 0, %s49
      %s51 = sphi 0, %s49
      %s52 = sphi 0, %s51
      %s66 = sphi 0, %s52
      %s70 = sphi 0, %s70
      %s72 = sphi 0, %s70
      %s73 = sphi 0, %s72
      %s87 = sphi 0, %s73
      %s91 = sphi 0, %s91
      %s93 = sphi 0, %s91
      %s94 = sphi 0, %s93
      %s108 = sphi 0, %s94
      %s112 = sphi 0, %s112
      %s114 = sphi 0, %s112
      %s115 = sphi 0, %s114
      %s129 = sphi 0, %s115
      %s135 = sphi 0, %s137
      %s138 = sphi 0, %s135
      %s139 = sphi 0, %s138
      %s155 = sphi 0, %s139
    $region4: #{tpu_custom_call.1} parent=1 // loop_header_branch
      %18 = sbr.rel (%p16) target = $region8
    $region5: #{tpu_custom_call.1} parent=1 // loop_body
      %s20 = ssub.s32 %s15, 1
      %s21 = ssub.s32 %s15, 2
      %s22 = sadd.s32 %s15, 1
      %s23 = ssub.s32 %s15, %s22
      %p24 = scmp.eq.s32.totalorder %s23, 0
      %s26 = sadd.s32 %s25, 1
      %s27 = scalar_select %p24, %s25, %s26
      %p30 = pneg %p24
      %p31 = scmp.eq.s32.totalorder %s15, 1
      %p32 = por %p30, %p31
      %p33 = scmp.ne.s32.totalorder %s25, %s28
      %p34 = scmp.eq.s32.totalorder %s15, 0
      %p35 = por %p33, %p34
      %p36 = scmp.ne.s32.totalorder %s25, %s28
      %p37 = scmp.eq.s32.totalorder %s20, 1
      %p38 = por %p36, %p37
      %p39 = scmp.ne.s32.totalorder %s28, %s29
      %p40 = scmp.eq.s32.totalorder %s20, 0
      %p41 = por %p39, %p40
      %p42 = scmp.ne.s32.totalorder %s28, %s29
      %p43 = scmp.eq.s32.totalorder %s21, 1
      %p44 = por %p42, %p43
      %p46 = scmp.ne.s32.totalorder %s29, %s45
      %p47 = scmp.eq.s32.totalorder %s21, 0
      %p48 = por %p46, %p47
      %s50 = sadd.s32 %s49, 1
      %p53 = scmp.eq.s32.totalorder %s15, 1
      %p54 = scmp.ne.s32.totalorder %s49, %s51
      %p55 = scmp.eq.s32.totalorder %s15, 0
      %p56 = por %p54, %p55
      %p57 = scmp.ne.s32.totalorder %s49, %s51
      %p58 = scmp.eq.s32.totalorder %s20, 1
      %p59 = por %p57, %p58
      %p60 = scmp.ne.s32.totalorder %s51, %s52
      %p61 = scmp.eq.s32.totalorder %s20, 0
      %p62 = por %p60, %p61
      %p63 = scmp.ne.s32.totalorder %s51, %s52
      %p64 = scmp.eq.s32.totalorder %s21, 1
      %p65 = por %p63, %p64
      %p67 = scmp.ne.s32.totalorder %s52, %s66
      %p68 = scmp.eq.s32.totalorder %s21, 0
      %p69 = por %p67, %p68
      %s71 = sadd.s32 %s70, 1
      %p74 = scmp.eq.s32.totalorder %s15, 1
      %p75 = scmp.ne.s32.totalorder %s70, %s72
      %p76 = scmp.eq.s32.totalorder %s15, 0
      %p77 = por %p75, %p76
      %p78 = scmp.ne.s32.totalorder %s70, %s72
      %p79 = scmp.eq.s32.totalorder %s20, 1
      %p80 = por %p78, %p79
      %p81 = scmp.ne.s32.totalorder %s72, %s73
      %p82 = scmp.eq.s32.totalorder %s20, 0
      %p83 = por %p81, %p82
      %p84 = scmp.ne.s32.totalorder %s72, %s73
      %p85 = scmp.eq.s32.totalorder %s21, 1
      %p86 = por %p84, %p85
      %p88 = scmp.ne.s32.totalorder %s73, %s87
      %p89 = scmp.eq.s32.totalorder %s21, 0
      %p90 = por %p88, %p89
      %s92 = sadd.s32 %s91, 1
      %p95 = scmp.eq.s32.totalorder %s15, 1
      %p96 = scmp.ne.s32.totalorder %s91, %s93
      %p97 = scmp.eq.s32.totalorder %s15, 0
      %p98 = por %p96, %p97
      %p99 = scmp.ne.s32.totalorder %s91, %s93
      %p100 = scmp.eq.s32.totalorder %s20, 1
      %p101 = por %p99, %p100
      %p102 = scmp.ne.s32.totalorder %s93, %s94
      %p103 = scmp.eq.s32.totalorder %s20, 0
      %p104 = por %p102, %p103
      %p105 = scmp.ne.s32.totalorder %s93, %s94
      %p106 = scmp.eq.s32.totalorder %s21, 1
      %p107 = por %p105, %p106
      %p109 = scmp.ne.s32.totalorder %s94, %s108
      %p110 = scmp.eq.s32.totalorder %s21, 0
      %p111 = por %p109, %p110
      %s113 = sadd.s32 %s112, 1
      %p116 = scmp.eq.s32.totalorder %s15, 1
      %p117 = scmp.ne.s32.totalorder %s112, %s114
      %p118 = scmp.eq.s32.totalorder %s15, 0
      %p119 = por %p117, %p118
      %p120 = scmp.ne.s32.totalorder %s112, %s114
      %p121 = scmp.eq.s32.totalorder %s20, 1
      %p122 = por %p120, %p121
      %p123 = scmp.ne.s32.totalorder %s114, %s115
      %p124 = scmp.eq.s32.totalorder %s20, 0
      %p125 = por %p123, %p124
      %p126 = scmp.ne.s32.totalorder %s114, %s115
      %p127 = scmp.eq.s32.totalorder %s21, 1
      %p128 = por %p126, %p127
      %p130 = scmp.ne.s32.totalorder %s115, %s129
      %p131 = scmp.eq.s32.totalorder %s21, 0
      %p132 = por %p130, %p131
      %s133 = ssub.s32 %s15, %s22
      %p134 = scmp.eq.s32.totalorder %s133, 0
      %s136 = sadd.s32 %s135, 1
      %s137 = scalar_select %p134, %s135, %s136
      %p140 = pneg %p134
      %p141 = scmp.eq.s32.totalorder %s15, 1
      %p142 = por %p140, %p141
      %p143 = scmp.ne.s32.totalorder %s135, %s138
      %p144 = scmp.eq.s32.totalorder %s15, 0
      %p145 = por %p143, %p144
      %p146 = scmp.ne.s32.totalorder %s135, %s138
      %p147 = scmp.eq.s32.totalorder %s20, 1
      %p148 = por %p146, %p147
      %p149 = scmp.ne.s32.totalorder %s138, %s139
      %p150 = scmp.eq.s32.totalorder %s20, 0
      %p151 = por %p149, %p150
      %p152 = scmp.ne.s32.totalorder %s138, %s139
      %p153 = scmp.eq.s32.totalorder %s21, 1
      %p154 = por %p152, %p153
      %p156 = scmp.ne.s32.totalorder %s139, %s155
      %p157 = scmp.eq.s32.totalorder %s21, 0
      %p158 = por %p156, %p157
      %p159 = scmp.le.s32.totalorder 1, %s15
      %p160 = scmp.lt.s32.totalorder %s15, 3
      %p161 = pnand %p159, %p160
      %p162 = pneg %p161
      // Predicated region
      $region9: #{tpu_custom_call.1} parent=5 // pred_check
        _
      $region10: #{tpu_custom_call.1} parent=5 // pred_check_branch
        %164 = sbr.rel (%p161) target = $region12
      $region11: #{tpu_custom_call.1} parent=5 // pred_region
        %s165 = ssub.s32 %s15, 1
        // Predicated region
        $region13: #{tpu_custom_call.1} parent=11 // pred_check
          %p166 = pneg %p62
        $region14: #{tpu_custom_call.1} parent=11 // pred_check_branch
          %168 = sbr.rel (%p166) target = $region16
        $region15: #{tpu_custom_call.1} parent=11 // pred_region
          _
        $region16: #{tpu_custom_call.1} parent=11 // pred_fallthru
          _
        // Predicated region
        $region17: #{tpu_custom_call.1} parent=11 // pred_check
          %p169 = pneg %p83
        $region18: #{tpu_custom_call.1} parent=11 // pred_check_branch
          %171 = sbr.rel (%p169) target = $region20
        $region19: #{tpu_custom_call.1} parent=11 // pred_region
          %s173 = ssub.s32 4096, 4096
          %174 = vsyncadd [#allocation4], %s173
          %s175 = sshll.u32 [#allocation3], 4
          %s176 = int_to_ptr.vmem [resolvable:$true] %s175
          %181 = dma.hbm_to_vmem [thread:$0]  %s2, 4096, %s176, [#allocation4], 64, 64, 4
        $region20: #{tpu_custom_call.1} parent=11 // pred_fallthru
          _
        // Predicated region
        $region21: #{tpu_custom_call.1} parent=11 // pred_check
          %p182 = pneg %p104
        $region22: #{tpu_custom_call.1} parent=11 // pred_check_branch
          %184 = sbr.rel (%p182) target = $region24
        $region23: #{tpu_custom_call.1} parent=11 // pred_region
          _
        $region24: #{tpu_custom_call.1} parent=11 // pred_fallthru
          _
        // Predicated region
        $region25: #{tpu_custom_call.1} parent=11 // pred_check
          %p185 = pneg %p125
        $region26: #{tpu_custom_call.1} parent=11 // pred_check_branch
          %187 = sbr.rel (%p185) target = $region28
        $region27: #{tpu_custom_call.1} parent=11 // pred_region
          _
        $region28: #{tpu_custom_call.1} parent=11 // pred_fallthru
          _
      $region12: #{tpu_custom_call.1} parent=5 // pred_fallthru
        _
      %p188 = scmp.lt.s32.totalorder %s15, 2
      // Predicated region
      $region29: #{tpu_custom_call.1} parent=5 // pred_check
        %p189 = pneg %p188
      $region30: #{tpu_custom_call.1} parent=5 // pred_check_branch
        %191 = sbr.rel (%p189) target = $region32
      $region31: #{tpu_custom_call.1} parent=5 // pred_region
        // Predicated region
        $region33: #{tpu_custom_call.1} parent=31 // pred_check
          %p192 = pneg %p35
        $region34: #{tpu_custom_call.1} parent=31 // pred_check_branch
          %194 = sbr.rel (%p192) target = $region36
        $region35: #{tpu_custom_call.1} parent=31 // pred_region
          %s195 = smul.u32 8, %s15
          %p196 = scmp.lt.s32.totalorder %s195, 15
          %s197 = scalar_select %p196, %s195, 15
          %s198 = smul.addr %s197, 8
          %s199 = scalar_lea.vmem %s0, %s198
          %s200 = smul.u32 8, %s15
        $region36: #{tpu_custom_call.1} parent=31 // pred_fallthru
          _
      $region32: #{tpu_custom_call.1} parent=5 // pred_fallthru
        _
      %p201 = scmp.le.s32.totalorder 1, %s15
      %p202 = scmp.lt.s32.totalorder %s15, 3
      %p203 = pnand %p201, %p202
      %p204 = pneg %p203
      // Predicated region
      $region37: #{tpu_custom_call.1} parent=5 // pred_check
        _
      $region38: #{tpu_custom_call.1} parent=5 // pred_check_branch
        %206 = sbr.rel (%p203) target = $region40
      $region39: #{tpu_custom_call.1} parent=5 // pred_region
        %s207 = ssub.s32 %s15, 1
        // Predicated region
        $region41: #{tpu_custom_call.1} parent=39 // pred_check
          %p208 = pneg %p83
        $region42: #{tpu_custom_call.1} parent=39 // pred_check_branch
          %210 = sbr.rel (%p208) target = $region44
        $region43: #{tpu_custom_call.1} parent=39 // pred_region
          %211 = dma.done [#allocation4], 4096
        $region44: #{tpu_custom_call.1} parent=39 // pred_fallthru
          _
        %s212 = smul.u32 8, %s20
        %p213 = scmp.lt.s32.totalorder %s212, 15
        %s214 = scalar_select %p213, %s212, 15
        %s215 = smul.addr %s214, 8
        %s216 = scalar_lea.vmem %s0, %s215
        %p217 = pneg %p41
        %p218 = pneg %p38
        %p219 = pneg %p62
        %p220 = pneg %p59
        %p221 = pneg %p83
        %p222 = pneg %p80
        %p223 = pneg %p104
        %p224 = pneg %p101
        %p225 = pneg %p125
        %p226 = pneg %p122
        %p227 = pneg %p151
        %p228 = pneg %p148
        %s229 = sand.u32 %s138, 1
        %s230 = scalar_lea.sflag [#allocation5], %s229
        %s231 = sand.u32 %s138, 1
        %s232 = smul.addr %s231, 64
        %s233 = scalar_lea.vmem [#allocation6], %s232
        %s234 = smul.u32 8, %s20
        %p235 = scmp.lt.s32.totalorder %s234, 15
        %s236 = scalar_select %p235, %s234, 15
        %s237 = smul.addr %s236, 8
        %s238 = scalar_lea.vmem %s0, %s237
        %s239 = smul.u32 8, %s20
        %s240 = smul.u32 8, %s20
        %242 = vst [vmem:[#allocation2] sm:$0xff] 0.0
        %243 = vst [vmem:[#allocation2 + $0x8] sm:$0xff] 0.0
        %244 = vst [vmem:[#allocation2 + $0x50] sm:$0xff] 0.0
        %245 = vst [vmem:[#allocation2 + $0x58] sm:$0xff] 0.0
        %v246 = vld [vmem:[%s3] sm:$0xff]
        %v247 = vld [vmem:[%s3 + $0x8] sm:$0xff]
        %v248 = vld [vmem:[%s4] sm:$0xff]
        %v249 = vld [vmem:[%s4 + $0x8] sm:$0xff]
        %v250 = vld [vmem:[%s4 + $0x10] sm:$0xff]
        %v251 = vld [vmem:[%s4 + $0x18] sm:$0xff]
        %v252 = vld [vmem:[%s4 + $0x20] sm:$0xff]
        %v253 = vld [vmem:[%s4 + $0x28] sm:$0xff]
        %v254 = vld [vmem:[%s4 + $0x30] sm:$0xff]
        %v255 = vld [vmem:[%s4 + $0x38] sm:$0xff]
        %v256 = vld [vmem:[%s238] sm:$0xff]
        %v257 = vld [vmem:[%s238 + $0x8] sm:$0xff]
        %v258 = vld [vmem:[%s238 + $0x10] sm:$0xff]
        %v259 = vld [vmem:[%s238 + $0x18] sm:$0xff]
        %v260 = vld [vmem:[%s238 + $0x20] sm:$0xff]
        %v261 = vld [vmem:[%s238 + $0x28] sm:$0xff]
        %v262 = vld [vmem:[%s238 + $0x30] sm:$0xff]
        %v263 = vld [vmem:[%s238 + $0x38] sm:$0xff]
        %v264 = vpack.c.bf16 %v257, %v256
        %v265 = vpack.c.bf16 %v259, %v258
        %v266 = vpack.c.bf16 %v261, %v260
        %v267 = vpack.c.bf16 %v263, %v262
        %v268 = vld [vmem:[%s1] sm:$0xf]
        %v269 = vld [vmem:[%s1 + $0x4] sm:$0xf]
        %v270 = vlaneseq
        %v271 = vshrl.u32 %v270, 7
        %v272 = vsub.s32 0, %v271
        %v273 = vrot.slane %v246, %v272
        %v276 = vunpack.c.l.b16 %v268
        %v277 = vunpack.c.l.b16 %v269
        %v278 = vpack.c.b16 %v277, %v276
        %vm280 = vcmask 130048
        %v282 = vsel %vm280, %v264, 0
        %v285 = vsel %vm280, %v265, 0
        %v288 = vsel %vm280, %v266, 0
        %v291 = vsel %vm280, %v267, 0
        %293 = vmatprep.subr.bf16.mxu0 0
        %294 = vmatpush1.bf16.msra.mxu0 %v278
        %295 = vmatprep.subr.bf16.mxu0 0
        %296 = vmatpush1.bf16.msra.mxu0 0
        %297 = vmatprep.subr.bf16.mxu0 0
        %298 = vmatpush1.bf16.msra.mxu0 0
        %299 = vmatprep.subr.bf16.mxu0 0
        %300 = vmatpush1.bf16.msra.mxu0 0
        %301 = vmatprep.subr.bf16.mxu0 0
        %302 = vmatpush1.bf16.msra.mxu0 0
        %303 = vmatprep.subr.bf16.mxu0 0
        %304 = vmatpush1.bf16.msra.mxu0 0
        %305 = vmatprep.subr.bf16.mxu0 0
        %306 = vmatpush1.bf16.msra.mxu0 0
        %307 = vmatprep.subr.bf16.mxu0 0
        %308 = vmatpush1.bf16.msra.mxu0 0
        %309 = vmatprep.subr.bf16.mxu0 0
        %310 = vmatpush1.bf16.msra.mxu0 0
        %311 = vmatprep.subr.bf16.mxu0 0
        %312 = vmatpush1.bf16.msra.mxu0 0
        %313 = vmatprep.subr.bf16.mxu0 0
        %314 = vmatpush1.bf16.msra.mxu0 0
        %315 = vmatprep.subr.bf16.mxu0 0
        %316 = vmatpush1.bf16.msra.mxu0 0
        %317 = vmatprep.subr.bf16.mxu0 0
        %318 = vmatpush1.bf16.msra.mxu0 0
        %319 = vmatprep.subr.bf16.mxu0 0
        %320 = vmatpush1.bf16.msra.mxu0 0
        %321 = vmatprep.subr.bf16.mxu0 0
        %322 = vmatpush1.bf16.msra.mxu0 0
        %323 = vmatprep.subr.bf16.mxu0 0
        %324 = vmatpush1.bf16.msra.mxu0 0
        %325 = vmatprep.mubr.bf16.mxu0 0
        %326 = vmatmul.mubr.bf16.gmra.mrb[0].mxu0 %v282
        %v327 = vpop.f32.mrb[0].mxu0
        %v328 = vadd.f32 %v273, %v327
        %v329 = vpop.f32.mrb[0].mxu0
        %v330 = vpop.f32.mrb[0].mxu0
        %v331 = vadd.f32 %v273, %v330
        %v332 = vpop.f32.mrb[0].mxu0
        %333 = vmatprep.mubr.bf16.mxu0 0
        %334 = vmatmul.mubr.bf16.gmra.mrb[0].mxu0 %v285
        %v335 = vpop.f32.mrb[0].mxu0
        %v336 = vadd.f32 %v273, %v335
        %v337 = vpop.f32.mrb[0].mxu0
        %v338 = vpop.f32.mrb[0].mxu0
        %v339 = vadd.f32 %v273, %v338
        %v340 = vpop.f32.mrb[0].mxu0
        %341 = vmatprep.mubr.bf16.mxu0 0
        %342 = vmatmul.mubr.bf16.gmra.mrb[0].mxu0 %v288
        %v343 = vpop.f32.mrb[0].mxu0
        %v344 = vadd.f32 %v273, %v343
        %v345 = vpop.f32.mrb[0].mxu0
        %v346 = vpop.f32.mrb[0].mxu0
        %v347 = vadd.f32 %v273, %v346
        %v348 = vpop.f32.mrb[0].mxu0
        %349 = vmatprep.mubr.bf16.mxu0 0
        %350 = vmatmul.mubr.bf16.gmra.mrb[0].mxu0 %v291
        %v351 = vpop.f32.mrb[0].mxu0
        %v352 = vadd.f32 %v273, %v351
        %v353 = vpop.f32.mrb[0].mxu0
        %v354 = vpop.f32.mrb[0].mxu0
        %v355 = vadd.f32 %v273, %v354
        %v356 = vpop.f32.mrb[0].mxu0
        %357 = vdwg.mxu0
        %vm358 = vcmp.gt.f32.partialorder %v328, 0.0
        %vm359 = vcmp.gt.f32.partialorder %v331, 0.0
        %vm360 = vcmp.gt.f32.partialorder %v336, 0.0
        %vm361 = vcmp.gt.f32.partialorder %v339, 0.0
        %vm362 = vcmp.gt.f32.partialorder %v344, 0.0
        %vm363 = vcmp.gt.f32.partialorder %v347, 0.0
        %vm364 = vcmp.gt.f32.partialorder %v352, 0.0
        %vm365 = vcmp.gt.f32.partialorder %v355, 0.0
        %v366 = vlaneseq
        %v367 = vshrl.u32 %v366, 7
        %v368 = vsub.s32 7, %v367
        %v369 = vrot.slane %v246, %v368
        %v370 = vmul.f32 %v369, %v328
        %v371 = vmul.f32 %v369, %v331
        %v372 = vmul.f32 %v369, %v336
        %v373 = vmul.f32 %v369, %v339
        %v374 = vmul.f32 %v369, %v344
        %v375 = vmul.f32 %v369, %v347
        %v376 = vmul.f32 %v369, %v352
        %v377 = vmul.f32 %v369, %v355
        %v378 = vsel %vm358, %v328, %v370
        %v379 = vsel %vm359, %v331, %v371
        %v380 = vsel %vm360, %v336, %v372
        %v381 = vsel %vm361, %v339, %v373
        %v382 = vsel %vm362, %v344, %v374
        %v383 = vsel %vm363, %v347, %v375
        %v384 = vsel %vm364, %v352, %v376
        %v385 = vsel %vm365, %v355, %v377
        %386 = vst [vmem:[#allocation2 + $0x10] sm:$0xff] %v378
        %387 = vst [vmem:[#allocation2 + $0x18] sm:$0xff] %v379
        %388 = vst [vmem:[#allocation2 + $0x20] sm:$0xff] %v380
        %389 = vst [vmem:[#allocation2 + $0x28] sm:$0xff] %v381
        %390 = vst [vmem:[#allocation2 + $0x30] sm:$0xff] %v382
        %391 = vst [vmem:[#allocation2 + $0x38] sm:$0xff] %v383
        %392 = vst [vmem:[#allocation2 + $0x40] sm:$0xff] %v384
        %393 = vst [vmem:[#allocation2 + $0x48] sm:$0xff] %v385
        %v394 = vld [vmem:[#allocation2 + $0x7] sm:$0xff]
        %v395 = vld [vmem:[#allocation2 + $0xf] sm:$0xff]
        %v396 = vld [vmem:[#allocation2 + $0x17] sm:$0xff]
        %v397 = vld [vmem:[#allocation2 + $0x1f] sm:$0xff]
        %v398 = vld [vmem:[#allocation2 + $0x27] sm:$0xff]
        %v399 = vld [vmem:[#allocation2 + $0x2f] sm:$0xff]
        %v400 = vld [vmem:[#allocation2 + $0x37] sm:$0xff]
        %v401 = vld [vmem:[#allocation2 + $0x3f] sm:$0xff]
        %v402 = vld [vmem:[#allocation2 + $0x8] sm:$0xff]
        %v403 = vld [vmem:[#allocation2 + $0x10] sm:$0xff]
        %v404 = vld [vmem:[#allocation2 + $0x18] sm:$0xff]
        %v405 = vld [vmem:[#allocation2 + $0x20] sm:$0xff]
        %v406 = vld [vmem:[#allocation2 + $0x28] sm:$0xff]
        %v407 = vld [vmem:[#allocation2 + $0x30] sm:$0xff]
        %v408 = vld [vmem:[#allocation2 + $0x38] sm:$0xff]
        %v409 = vld [vmem:[#allocation2 + $0x40] sm:$0xff]
        %410 = vrot.lane.b32.xlu0 %v402, 8
        %v411 = vpop.permute.xlu0 %410
        %412 = vrot.lane.b32.xlu0 %v403, 8
        %v413 = vpop.permute.xlu0 %412
        %414 = vrot.lane.b32.xlu0 %v404, 8
        %v415 = vpop.permute.xlu0 %414
        %416 = vrot.lane.b32.xlu0 %v405, 8
        %v417 = vpop.permute.xlu0 %416
        %418 = vrot.lane.b32.xlu0 %v406, 8
        %v419 = vpop.permute.xlu0 %418
        %420 = vrot.lane.b32.xlu0 %v407, 8
        %v421 = vpop.permute.xlu0 %420
        %422 = vrot.lane.b32.xlu0 %v408, 8
        %v423 = vpop.permute.xlu0 %422
        %424 = vrot.lane.b32.xlu0 %v409, 8
        %v425 = vpop.permute.xlu0 %424
        %v426 = vadd.f32 %v394, %v411
        %v427 = vadd.f32 %v395, %v413
        %v428 = vadd.f32 %v396, %v415
        %v429 = vadd.f32 %v397, %v417
        %v430 = vadd.f32 %v398, %v419
        %v431 = vadd.f32 %v399, %v421
        %v432 = vadd.f32 %v400, %v423
        %v433 = vadd.f32 %v401, %v425
        %v434 = vld [vmem:[#allocation2 + $0x9] sm:$0xff]
        %v435 = vld [vmem:[#allocation2 + $0x11] sm:$0xff]
        %v436 = vld [vmem:[#allocation2 + $0x19] sm:$0xff]
        %v437 = vld [vmem:[#allocation2 + $0x21] sm:$0xff]
        %v438 = vld [vmem:[#allocation2 + $0x29] sm:$0xff]
        %v439 = vld [vmem:[#allocation2 + $0x31] sm:$0xff]
        %v440 = vld [vmem:[#allocation2 + $0x39] sm:$0xff]
        %v441 = vld [vmem:[#allocation2 + $0x41] sm:$0xff]
        %442 = vrot.lane.b32.xlu0 %v434, 16
        %v443 = vpop.permute.xlu0 %442
        %444 = vrot.lane.b32.xlu0 %v435, 16
        %v445 = vpop.permute.xlu0 %444
        %446 = vrot.lane.b32.xlu0 %v436, 16
        %v447 = vpop.permute.xlu0 %446
        %448 = vrot.lane.b32.xlu0 %v437, 16
        %v449 = vpop.permute.xlu0 %448
        %450 = vrot.lane.b32.xlu0 %v438, 16
        %v451 = vpop.permute.xlu0 %450
        %452 = vrot.lane.b32.xlu0 %v439, 16
        %v453 = vpop.permute.xlu0 %452
        %454 = vrot.lane.b32.xlu0 %v440, 16
        %v455 = vpop.permute.xlu0 %454
        %456 = vrot.lane.b32.xlu0 %v441, 16
        %v457 = vpop.permute.xlu0 %456
        %v458 = vadd.f32 %v426, %v443
        %v459 = vadd.f32 %v427, %v445
        %v460 = vadd.f32 %v428, %v447
        %v461 = vadd.f32 %v429, %v449
        %v462 = vadd.f32 %v430, %v451
        %v463 = vadd.f32 %v431, %v453
        %v464 = vadd.f32 %v432, %v455
        %v465 = vadd.f32 %v433, %v457
        %v466 = vld [vmem:[#allocation2 + $0x47] sm:$0xff]
        %467 = vrot.lane.b32.xlu0 %v395, 24
        %v468 = vpop.permute.xlu0 %467
        %469 = vrot.lane.b32.xlu0 %v396, 24
        %v470 = vpop.permute.xlu0 %469
        %471 = vrot.lane.b32.xlu0 %v397, 24
        %v472 = vpop.permute.xlu0 %471
        %473 = vrot.lane.b32.xlu0 %v398, 24
        %v474 = vpop.permute.xlu0 %473
        %475 = vrot.lane.b32.xlu0 %v399, 24
        %v476 = vpop.permute.xlu0 %475
        %477 = vrot.lane.b32.xlu0 %v400, 24
        %v478 = vpop.permute.xlu0 %477
        %479 = vrot.lane.b32.xlu0 %v401, 24
        %v480 = vpop.permute.xlu0 %479
        %481 = vrot.lane.b32.xlu0 %v466, 24
        %v482 = vpop.permute.xlu0 %481
        %v483 = vadd.f32 %v458, %v468
        %v484 = vadd.f32 %v459, %v470
        %v485 = vadd.f32 %v460, %v472
        %v486 = vadd.f32 %v461, %v474
        %v487 = vadd.f32 %v462, %v476
        %v488 = vadd.f32 %v463, %v478
        %v489 = vadd.f32 %v464, %v480
        %v490 = vadd.f32 %v465, %v482
        %v491 = vld [vmem:[#allocation2 + $0x48] sm:$0xff]
        %492 = vrot.lane.b32.xlu0 %v403, 32
        %v493 = vpop.permute.xlu0 %492
        %494 = vrot.lane.b32.xlu0 %v404, 32
        %v495 = vpop.permute.xlu0 %494
        %496 = vrot.lane.b32.xlu0 %v405, 32
        %v497 = vpop.permute.xlu0 %496
        %498 = vrot.lane.b32.xlu0 %v406, 32
        %v499 = vpop.permute.xlu0 %498
        %500 = vrot.lane.b32.xlu0 %v407, 32
        %v501 = vpop.permute.xlu0 %500
        %502 = vrot.lane.b32.xlu0 %v408, 32
        %v503 = vpop.permute.xlu0 %502
        %504 = vrot.lane.b32.xlu0 %v409, 32
        %v505 = vpop.permute.xlu0 %504
        %506 = vrot.lane.b32.xlu0 %v491, 32
        %v507 = vpop.permute.xlu0 %506
        %v508 = vadd.f32 %v483, %v493
        %v509 = vadd.f32 %v484, %v495
        %v510 = vadd.f32 %v485, %v497
        %v511 = vadd.f32 %v486, %v499
        %v512 = vadd.f32 %v487, %v501
        %v513 = vadd.f32 %v488, %v503
        %v514 = vadd.f32 %v489, %v505
        %v515 = vadd.f32 %v490, %v507
        %v516 = vld [vmem:[#allocation2 + $0x49] sm:$0xff]
        %517 = vrot.lane.b32.xlu0 %v435, 40
        %v518 = vpop.permute.xlu0 %517
        %519 = vrot.lane.b32.xlu0 %v436, 40
        %v520 = vpop.permute.xlu0 %519
        %521 = vrot.lane.b32.xlu0 %v437, 40
        %v522 = vpop.permute.xlu0 %521
        %523 = vrot.lane.b32.xlu0 %v438, 40
        %v524 = vpop.permute.xlu0 %523
        %525 = vrot.lane.b32.xlu0 %v439, 40
        %v526 = vpop.permute.xlu0 %525
        %527 = vrot.lane.b32.xlu0 %v440, 40
        %v528 = vpop.permute.xlu0 %527
        %529 = vrot.lane.b32.xlu0 %v441, 40
        %v530 = vpop.permute.xlu0 %529
        %531 = vrot.lane.b32.xlu0 %v516, 40
        %v532 = vpop.permute.xlu0 %531
        %v533 = vadd.f32 %v508, %v518
        %v534 = vadd.f32 %v509, %v520
        %v535 = vadd.f32 %v510, %v522
        %v536 = vadd.f32 %v511, %v524
        %v537 = vadd.f32 %v512, %v526
        %v538 = vadd.f32 %v513, %v528
        %v539 = vadd.f32 %v514, %v530
        %v540 = vadd.f32 %v515, %v532
        %v541 = vld [vmem:[#allocation2 + $0x4f] sm:$0xff]
        %542 = vrot.lane.b32.xlu0 %v396, 48
        %v543 = vpop.permute.xlu0 %542
        %544 = vrot.lane.b32.xlu0 %v397, 48
        %v545 = vpop.permute.xlu0 %544
        %546 = vrot.lane.b32.xlu0 %v398, 48
        %v547 = vpop.permute.xlu0 %546
        %548 = vrot.lane.b32.xlu0 %v399, 48
        %v549 = vpop.permute.xlu0 %548
        %550 = vrot.lane.b32.xlu0 %v400, 48
        %v551 = vpop.permute.xlu0 %550
        %552 = vrot.lane.b32.xlu0 %v401, 48
        %v553 = vpop.permute.xlu0 %552
        %554 = vrot.lane.b32.xlu0 %v466, 48
        %v555 = vpop.permute.xlu0 %554
        %556 = vrot.lane.b32.xlu0 %v541, 48
        %v557 = vpop.permute.xlu0 %556
        %v558 = vadd.f32 %v533, %v543
        %v559 = vadd.f32 %v534, %v545
        %v560 = vadd.f32 %v535, %v547
        %v561 = vadd.f32 %v536, %v549
        %v562 = vadd.f32 %v537, %v551
        %v563 = vadd.f32 %v538, %v553
        %v564 = vadd.f32 %v539, %v555
        %v565 = vadd.f32 %v540, %v557
        %v566 = vld [vmem:[#allocation2 + $0x50] sm:$0xff]
        %567 = vrot.lane.b32.xlu0 %v404, 56
        %v568 = vpop.permute.xlu0 %567
        %569 = vrot.lane.b32.xlu0 %v405, 56
        %v570 = vpop.permute.xlu0 %569
        %571 = vrot.lane.b32.xlu0 %v406, 56
        %v572 = vpop.permute.xlu0 %571
        %573 = vrot.lane.b32.xlu0 %v407, 56
        %v574 = vpop.permute.xlu0 %573
        %575 = vrot.lane.b32.xlu0 %v408, 56
        %v576 = vpop.permute.xlu0 %575
        %577 = vrot.lane.b32.xlu0 %v409, 56
        %v578 = vpop.permute.xlu0 %577
        %579 = vrot.lane.b32.xlu0 %v491, 56
        %v580 = vpop.permute.xlu0 %579
        %581 = vrot.lane.b32.xlu0 %v566, 56
        %v582 = vpop.permute.xlu0 %581
        %v583 = vadd.f32 %v558, %v568
        %v584 = vadd.f32 %v559, %v570
        %v585 = vadd.f32 %v560, %v572
        %v586 = vadd.f32 %v561, %v574
        %v587 = vadd.f32 %v562, %v576
        %v588 = vadd.f32 %v563, %v578
        %v589 = vadd.f32 %v564, %v580
        %v590 = vadd.f32 %v565, %v582
        %v591 = vld [vmem:[#allocation2 + $0x51] sm:$0xff]
        %592 = vrot.lane.b32.xlu0 %v436, 64
        %v593 = vpop.permute.xlu0 %592
        %594 = vrot.lane.b32.xlu0 %v437, 64
        %v595 = vpop.permute.xlu0 %594
        %596 = vrot.lane.b32.xlu0 %v438, 64
        %v597 = vpop.permute.xlu0 %596
        %598 = vrot.lane.b32.xlu0 %v439, 64
        %v599 = vpop.permute.xlu0 %598
        %600 = vrot.lane.b32.xlu0 %v440, 64
        %v601 = vpop.permute.xlu0 %600
        %602 = vrot.lane.b32.xlu0 %v441, 64
        %v603 = vpop.permute.xlu0 %602
        %604 = vrot.lane.b32.xlu0 %v516, 64
        %v605 = vpop.permute.xlu0 %604
        %606 = vrot.lane.b32.xlu0 %v591, 64
        %v607 = vpop.permute.xlu0 %606
        %v608 = vadd.f32 %v583, %v593
        %v609 = vadd.f32 %v584, %v595
        %v610 = vadd.f32 %v585, %v597
        %v611 = vadd.f32 %v586, %v599
        %v612 = vadd.f32 %v587, %v601
        %v613 = vadd.f32 %v588, %v603
        %v614 = vadd.f32 %v589, %v605
        %v615 = vadd.f32 %v590, %v607
        %v616 = vmul.f32 %v608, %v248
        %v617 = vmul.f32 %v609, %v249
        %v618 = vmul.f32 %v610, %v250
        %v619 = vmul.f32 %v611, %v251
        %v620 = vmul.f32 %v612, %v252
        %v621 = vmul.f32 %v613, %v253
        %v622 = vmul.f32 %v614, %v254
        %v623 = vmul.f32 %v615, %v255
        %v624 = vpack.c.bf16 %v617, %v616
        %v625 = vpack.c.bf16 %v619, %v618
        %v626 = vpack.c.bf16 %v621, %v620
        %v627 = vpack.c.bf16 %v623, %v622
        %v628 = vld [vmem:[#allocation3] sm:$0xf]
        %v629 = vld [vmem:[#allocation3 + $0x4] sm:$0xf]
        %v630 = vld [vmem:[#allocation3 + $0x8] sm:$0xf]
        %v631 = vld [vmem:[#allocation3 + $0xc] sm:$0xf]
        %v632 = vld [vmem:[#allocation3 + $0x10] sm:$0xf]
        %v633 = vld [vmem:[#allocation3 + $0x14] sm:$0xf]
        %v634 = vld [vmem:[#allocation3 + $0x18] sm:$0xf]
        %v635 = vld [vmem:[#allocation3 + $0x1c] sm:$0xf]
        %v636 = vld [vmem:[#allocation3 + $0x20] sm:$0xf]
        %v637 = vld [vmem:[#allocation3 + $0x24] sm:$0xf]
        %v638 = vld [vmem:[#allocation3 + $0x28] sm:$0xf]
        %v639 = vld [vmem:[#allocation3 + $0x2c] sm:$0xf]
        %v640 = vld [vmem:[#allocation3 + $0x30] sm:$0xf]
        %v641 = vld [vmem:[#allocation3 + $0x34] sm:$0xf]
        %v642 = vld [vmem:[#allocation3 + $0x38] sm:$0xf]
        %v643 = vld [vmem:[#allocation3 + $0x3c] sm:$0xf]
        %v644 = vlaneseq
        %v645 = vshrl.u32 %v644, 7
        %v646 = vsub.s32 1, %v645
        %v647 = vrot.slane %v246, %v646
        %v664 = vunpack.c.l.b16 %v628
        %v665 = vunpack.c.l.b16 %v629
        %v666 = vunpack.c.l.b16 %v630
        %v667 = vunpack.c.l.b16 %v631
        %v668 = vunpack.c.l.b16 %v632
        %v669 = vunpack.c.l.b16 %v633
        %v670 = vunpack.c.l.b16 %v634
        %v671 = vunpack.c.l.b16 %v635
        %v672 = vunpack.c.l.b16 %v636
        %v673 = vunpack.c.l.b16 %v637
        %v674 = vunpack.c.l.b16 %v638
        %v675 = vunpack.c.l.b16 %v639
        %v676 = vunpack.c.l.b16 %v640
        %v677 = vunpack.c.l.b16 %v641
        %v678 = vunpack.c.l.b16 %v642
        %v679 = vunpack.c.l.b16 %v643
        %v680 = vpack.c.b16 %v665, %v664
        %v681 = vpack.c.b16 %v667, %v666
        %v682 = vpack.c.b16 %v669, %v668
        %v683 = vpack.c.b16 %v671, %v670
        %v684 = vpack.c.b16 %v673, %v672
        %v685 = vpack.c.b16 %v675, %v674
        %v686 = vpack.c.b16 %v677, %v676
        %v687 = vpack.c.b16 %v679, %v678
        %696 = vmatprep.subr.bf16.mxu0 0
        %697 = vmatpush1.bf16.msra.mxu0 %v680
        %698 = vmatprep.subr.bf16.mxu0 0
        %699 = vmatpush1.bf16.msra.mxu0 %v681
        %700 = vmatprep.subr.bf16.mxu0 0
        %701 = vmatpush1.bf16.msra.mxu0 %v682
        %702 = vmatprep.subr.bf16.mxu0 0
        %703 = vmatpush1.bf16.msra.mxu0 %v683
        %704 = vmatprep.subr.bf16.mxu0 0
        %705 = vmatpush1.bf16.msra.mxu0 %v684
        %706 = vmatprep.subr.bf16.mxu0 0
        %707 = vmatpush1.bf16.msra.mxu0 %v685
        %708 = vmatprep.subr.bf16.mxu0 0
        %709 = vmatpush1.bf16.msra.mxu0 %v686
        %710 = vmatprep.subr.bf16.mxu0 0
        %711 = vmatpush1.bf16.msra.mxu0 %v687
        %712 = vmatprep.subr.bf16.mxu0 0
        %713 = vmatpush1.bf16.msra.mxu0 0
        %714 = vmatprep.subr.bf16.mxu0 0
        %715 = vmatpush1.bf16.msra.mxu0 0
        %716 = vmatprep.subr.bf16.mxu0 0
        %717 = vmatpush1.bf16.msra.mxu0 0
        %718 = vmatprep.subr.bf16.mxu0 0
        %719 = vmatpush1.bf16.msra.mxu0 0
        %720 = vmatprep.subr.bf16.mxu0 0
        %721 = vmatpush1.bf16.msra.mxu0 0
        %722 = vmatprep.subr.bf16.mxu0 0
        %723 = vmatpush1.bf16.msra.mxu0 0
        %724 = vmatprep.subr.bf16.mxu0 0
        %725 = vmatpush1.bf16.msra.mxu0 0
        %726 = vmatprep.subr.bf16.mxu0 0
        %727 = vmatpush1.bf16.msra.mxu0 0
        %728 = vmatprep.mubr.bf16.mxu0 0
        %729 = vmatmul.mubr.bf16.gmra.mrb[0].mxu0 %v624
        %v730 = vpop.f32.mrb[0].mxu0
        %v731 = vadd.f32 %v647, %v730
        %v732 = vpop.f32.mrb[0].mxu0
        %v733 = vpop.f32.mrb[0].mxu0
        %v734 = vadd.f32 %v647, %v733
        %v735 = vpop.f32.mrb[0].mxu0
        %736 = vmatprep.mubr.bf16.mxu0 0
        %737 = vmatmul.mubr.bf16.gmra.mrb[0].mxu0 %v625
        %v738 = vpop.f32.mrb[0].mxu0
        %v739 = vadd.f32 %v647, %v738
        %v740 = vpop.f32.mrb[0].mxu0
        %v741 = vpop.f32.mrb[0].mxu0
        %v742 = vadd.f32 %v647, %v741
        %v743 = vpop.f32.mrb[0].mxu0
        %744 = vmatprep.mubr.bf16.mxu0 0
        %745 = vmatmul.mubr.bf16.gmra.mrb[0].mxu0 %v626
        %v746 = vpop.f32.mrb[0].mxu0
        %v747 = vadd.f32 %v647, %v746
        %v748 = vpop.f32.mrb[0].mxu0
        %v749 = vpop.f32.mrb[0].mxu0
        %v750 = vadd.f32 %v647, %v749
        %v751 = vpop.f32.mrb[0].mxu0
        %752 = vmatprep.mubr.bf16.mxu0 0
        %753 = vmatmul.mubr.bf16.gmra.mrb[0].mxu0 %v627
        %v754 = vpop.f32.mrb[0].mxu0
        %v755 = vadd.f32 %v647, %v754
        %v756 = vpop.f32.mrb[0].mxu0
        %v757 = vpop.f32.mrb[0].mxu0
        %v758 = vadd.f32 %v647, %v757
        %v759 = vpop.f32.mrb[0].mxu0
        %760 = vdwg.mxu0
        %vm761 = vcmp.gt.f32.partialorder %v731, 0.0
        %vm762 = vcmp.gt.f32.partialorder %v734, 0.0
        %vm763 = vcmp.gt.f32.partialorder %v739, 0.0
        %vm764 = vcmp.gt.f32.partialorder %v742, 0.0
        %vm765 = vcmp.gt.f32.partialorder %v747, 0.0
        %vm766 = vcmp.gt.f32.partialorder %v750, 0.0
        %vm767 = vcmp.gt.f32.partialorder %v755, 0.0
        %vm768 = vcmp.gt.f32.partialorder %v758, 0.0
        %v769 = vlaneseq
        %v770 = vshrl.u32 %v769, 7
        %v771 = vsub.s32 0, %v770
        %v772 = vrot.slane %v247, %v771
        %v773 = vmul.f32 %v772, %v731
        %v774 = vmul.f32 %v772, %v734
        %v775 = vmul.f32 %v772, %v739
        %v776 = vmul.f32 %v772, %v742
        %v777 = vmul.f32 %v772, %v747
        %v778 = vmul.f32 %v772, %v750
        %v779 = vmul.f32 %v772, %v755
        %v780 = vmul.f32 %v772, %v758
        %v781 = vsel %vm761, %v731, %v773
        %v782 = vsel %vm762, %v734, %v774
        %v783 = vsel %vm763, %v739, %v775
        %v784 = vsel %vm764, %v742, %v776
        %v785 = vsel %vm765, %v747, %v777
        %v786 = vsel %vm766, %v750, %v778
        %v787 = vsel %vm767, %v755, %v779
        %v788 = vsel %vm768, %v758, %v780
        %789 = vst [vmem:[#allocation2 + $0x10] sm:$0xff] %v781
        %790 = vst [vmem:[#allocation2 + $0x18] sm:$0xff] %v782
        %791 = vst [vmem:[#allocation2 + $0x20] sm:$0xff] %v783
        %792 = vst [vmem:[#allocation2 + $0x28] sm:$0xff] %v784
        %793 = vst [vmem:[#allocation2 + $0x30] sm:$0xff] %v785
        %794 = vst [vmem:[#allocation2 + $0x38] sm:$0xff] %v786
        %795 = vst [vmem:[#allocation2 + $0x40] sm:$0xff] %v787
        %796 = vst [vmem:[#allocation2 + $0x48] sm:$0xff] %v788
        %v797 = vld [vmem:[#allocation2 + $0x7] sm:$0xff]
        %v798 = vld [vmem:[#allocation2 + $0xf] sm:$0xff]
        %v799 = vld [vmem:[#allocation2 + $0x17] sm:$0xff]
        %v800 = vld [vmem:[#allocation2 + $0x1f] sm:$0xff]
        %v801 = vld [vmem:[#allocation2 + $0x27] sm:$0xff]
        %v802 = vld [vmem:[#allocation2 + $0x2f] sm:$0xff]
        %v803 = vld [vmem:[#allocation2 + $0x37] sm:$0xff]
        %v804 = vld [vmem:[#allocation2 + $0x3f] sm:$0xff]
        %v805 = vld [vmem:[#allocation2 + $0x8] sm:$0xff]
        %v806 = vld [vmem:[#allocation2 + $0x10] sm:$0xff]
        %v807 = vld [vmem:[#allocation2 + $0x18] sm:$0xff]
        %v808 = vld [vmem:[#allocation2 + $0x20] sm:$0xff]
        %v809 = vld [vmem:[#allocation2 + $0x28] sm:$0xff]
        %v810 = vld [vmem:[#allocation2 + $0x30] sm:$0xff]
        %v811 = vld [vmem:[#allocation2 + $0x38] sm:$0xff]
        %v812 = vld [vmem:[#allocation2 + $0x40] sm:$0xff]
        %813 = vrot.lane.b32.xlu0 %v805, 8
        %v814 = vpop.permute.xlu0 %813
        %815 = vrot.lane.b32.xlu0 %v806, 8
        %v816 = vpop.permute.xlu0 %815
        %817 = vrot.lane.b32.xlu0 %v807, 8
        %v818 = vpop.permute.xlu0 %817
        %819 = vrot.lane.b32.xlu0 %v808, 8
        %v820 = vpop.permute.xlu0 %819
        %821 = vrot.lane.b32.xlu0 %v809, 8
        %v822 = vpop.permute.xlu0 %821
        %823 = vrot.lane.b32.xlu0 %v810, 8
        %v824 = vpop.permute.xlu0 %823
        %825 = vrot.lane.b32.xlu0 %v811, 8
        %v826 = vpop.permute.xlu0 %825
        %827 = vrot.lane.b32.xlu0 %v812, 8
        %v828 = vpop.permute.xlu0 %827
        %v829 = vadd.f32 %v797, %v814
        %v830 = vadd.f32 %v798, %v816
        %v831 = vadd.f32 %v799, %v818
        %v832 = vadd.f32 %v800, %v820
        %v833 = vadd.f32 %v801, %v822
        %v834 = vadd.f32 %v802, %v824
        %v835 = vadd.f32 %v803, %v826
        %v836 = vadd.f32 %v804, %v828
        %v837 = vld [vmem:[#allocation2 + $0x9] sm:$0xff]
        %v838 = vld [vmem:[#allocation2 + $0x11] sm:$0xff]
        %v839 = vld [vmem:[#allocation2 + $0x19] sm:$0xff]
        %v840 = vld [vmem:[#allocation2 + $0x21] sm:$0xff]
        %v841 = vld [vmem:[#allocation2 + $0x29] sm:$0xff]
        %v842 = vld [vmem:[#allocation2 + $0x31] sm:$0xff]
        %v843 = vld [vmem:[#allocation2 + $0x39] sm:$0xff]
        %v844 = vld [vmem:[#allocation2 + $0x41] sm:$0xff]
        %845 = vrot.lane.b32.xlu0 %v837, 16
        %v846 = vpop.permute.xlu0 %845
        %847 = vrot.lane.b32.xlu0 %v838, 16
        %v848 = vpop.permute.xlu0 %847
        %849 = vrot.lane.b32.xlu0 %v839, 16
        %v850 = vpop.permute.xlu0 %849
        %851 = vrot.lane.b32.xlu0 %v840, 16
        %v852 = vpop.permute.xlu0 %851
        %853 = vrot.lane.b32.xlu0 %v841, 16
        %v854 = vpop.permute.xlu0 %853
        %855 = vrot.lane.b32.xlu0 %v842, 16
        %v856 = vpop.permute.xlu0 %855
        %857 = vrot.lane.b32.xlu0 %v843, 16
        %v858 = vpop.permute.xlu0 %857
        %859 = vrot.lane.b32.xlu0 %v844, 16
        %v860 = vpop.permute.xlu0 %859
        %v861 = vadd.f32 %v829, %v846
        %v862 = vadd.f32 %v830, %v848
        %v863 = vadd.f32 %v831, %v850
        %v864 = vadd.f32 %v832, %v852
        %v865 = vadd.f32 %v833, %v854
        %v866 = vadd.f32 %v834, %v856
        %v867 = vadd.f32 %v835, %v858
        %v868 = vadd.f32 %v836, %v860
        %v869 = vld [vmem:[#allocation2 + $0x47] sm:$0xff]
        %870 = vrot.lane.b32.xlu0 %v798, 24
        %v871 = vpop.permute.xlu0 %870
        %872 = vrot.lane.b32.xlu0 %v799, 24
        %v873 = vpop.permute.xlu0 %872
        %874 = vrot.lane.b32.xlu0 %v800, 24
        %v875 = vpop.permute.xlu0 %874
        %876 = vrot.lane.b32.xlu0 %v801, 24
        %v877 = vpop.permute.xlu0 %876
        %878 = vrot.lane.b32.xlu0 %v802, 24
        %v879 = vpop.permute.xlu0 %878
        %880 = vrot.lane.b32.xlu0 %v803, 24
        %v881 = vpop.permute.xlu0 %880
        %882 = vrot.lane.b32.xlu0 %v804, 24
        %v883 = vpop.permute.xlu0 %882
        %884 = vrot.lane.b32.xlu0 %v869, 24
        %v885 = vpop.permute.xlu0 %884
        %v886 = vadd.f32 %v861, %v871
        %v887 = vadd.f32 %v862, %v873
        %v888 = vadd.f32 %v863, %v875
        %v889 = vadd.f32 %v864, %v877
        %v890 = vadd.f32 %v865, %v879
        %v891 = vadd.f32 %v866, %v881
        %v892 = vadd.f32 %v867, %v883
        %v893 = vadd.f32 %v868, %v885
        %v894 = vld [vmem:[#allocation2 + $0x48] sm:$0xff]
        %895 = vrot.lane.b32.xlu0 %v806, 32
        %v896 = vpop.permute.xlu0 %895
        %897 = vrot.lane.b32.xlu0 %v807, 32
        %v898 = vpop.permute.xlu0 %897
        %899 = vrot.lane.b32.xlu0 %v808, 32
        %v900 = vpop.permute.xlu0 %899
        %901 = vrot.lane.b32.xlu0 %v809, 32
        %v902 = vpop.permute.xlu0 %901
        %903 = vrot.lane.b32.xlu0 %v810, 32
        %v904 = vpop.permute.xlu0 %903
        %905 = vrot.lane.b32.xlu0 %v811, 32
        %v906 = vpop.permute.xlu0 %905
        %907 = vrot.lane.b32.xlu0 %v812, 32
        %v908 = vpop.permute.xlu0 %907
        %909 = vrot.lane.b32.xlu0 %v894, 32
        %v910 = vpop.permute.xlu0 %909
        %v911 = vadd.f32 %v886, %v896
        %v912 = vadd.f32 %v887, %v898
        %v913 = vadd.f32 %v888, %v900
        %v914 = vadd.f32 %v889, %v902
        %v915 = vadd.f32 %v890, %v904
        %v916 = vadd.f32 %v891, %v906
        %v917 = vadd.f32 %v892, %v908
        %v918 = vadd.f32 %v893, %v910
        %v919 = vld [vmem:[#allocation2 + $0x49] sm:$0xff]
        %920 = vrot.lane.b32.xlu0 %v838, 40
        %v921 = vpop.permute.xlu0 %920
        %922 = vrot.lane.b32.xlu0 %v839, 40
        %v923 = vpop.permute.xlu0 %922
        %924 = vrot.lane.b32.xlu0 %v840, 40
        %v925 = vpop.permute.xlu0 %924
        %926 = vrot.lane.b32.xlu0 %v841, 40
        %v927 = vpop.permute.xlu0 %926
        %928 = vrot.lane.b32.xlu0 %v842, 40
        %v929 = vpop.permute.xlu0 %928
        %930 = vrot.lane.b32.xlu0 %v843, 40
        %v931 = vpop.permute.xlu0 %930
        %932 = vrot.lane.b32.xlu0 %v844, 40
        %v933 = vpop.permute.xlu0 %932
        %934 = vrot.lane.b32.xlu0 %v919, 40
        %v935 = vpop.permute.xlu0 %934
        %v936 = vadd.f32 %v911, %v921
        %v937 = vadd.f32 %v912, %v923
        %v938 = vadd.f32 %v913, %v925
        %v939 = vadd.f32 %v914, %v927
        %v940 = vadd.f32 %v915, %v929
        %v941 = vadd.f32 %v916, %v931
        %v942 = vadd.f32 %v917, %v933
        %v943 = vadd.f32 %v918, %v935
        %v944 = vld [vmem:[#allocation2 + $0x4f] sm:$0xff]
        %945 = vrot.lane.b32.xlu0 %v799, 48
        %v946 = vpop.permute.xlu0 %945
        %947 = vrot.lane.b32.xlu0 %v800, 48
        %v948 = vpop.permute.xlu0 %947
        %949 = vrot.lane.b32.xlu0 %v801, 48
        %v950 = vpop.permute.xlu0 %949
        %951 = vrot.lane.b32.xlu0 %v802, 48
        %v952 = vpop.permute.xlu0 %951
        %953 = vrot.lane.b32.xlu0 %v803, 48
        %v954 = vpop.permute.xlu0 %953
        %955 = vrot.lane.b32.xlu0 %v804, 48
        %v956 = vpop.permute.xlu0 %955
        %957 = vrot.lane.b32.xlu0 %v869, 48
        %v958 = vpop.permute.xlu0 %957
        %959 = vrot.lane.b32.xlu0 %v944, 48
        %v960 = vpop.permute.xlu0 %959
        %v961 = vadd.f32 %v936, %v946
        %v962 = vadd.f32 %v937, %v948
        %v963 = vadd.f32 %v938, %v950
        %v964 = vadd.f32 %v939, %v952
        %v965 = vadd.f32 %v940, %v954
        %v966 = vadd.f32 %v941, %v956
        %v967 = vadd.f32 %v942, %v958
        %v968 = vadd.f32 %v943, %v960
        %v969 = vld [vmem:[#allocation2 + $0x50] sm:$0xff]
        %970 = vrot.lane.b32.xlu0 %v807, 56
        %v971 = vpop.permute.xlu0 %970
        %972 = vrot.lane.b32.xlu0 %v808, 56
        %v973 = vpop.permute.xlu0 %972
        %974 = vrot.lane.b32.xlu0 %v809, 56
        %v975 = vpop.permute.xlu0 %974
        %976 = vrot.lane.b32.xlu0 %v810, 56
        %v977 = vpop.permute.xlu0 %976
        %978 = vrot.lane.b32.xlu0 %v811, 56
        %v979 = vpop.permute.xlu0 %978
        %980 = vrot.lane.b32.xlu0 %v812, 56
        %v981 = vpop.permute.xlu0 %980
        %982 = vrot.lane.b32.xlu0 %v894, 56
        %v983 = vpop.permute.xlu0 %982
        %984 = vrot.lane.b32.xlu0 %v969, 56
        %v985 = vpop.permute.xlu0 %984
        %v986 = vadd.f32 %v961, %v971
        %v987 = vadd.f32 %v962, %v973
        %v988 = vadd.f32 %v963, %v975
        %v989 = vadd.f32 %v964, %v977
        %v990 = vadd.f32 %v965, %v979
        %v991 = vadd.f32 %v966, %v981
        %v992 = vadd.f32 %v967, %v983
        %v993 = vadd.f32 %v968, %v985
        %v994 = vld [vmem:[#allocation2 + $0x51] sm:$0xff]
        %995 = vrot.lane.b32.xlu0 %v839, 64
        %v996 = vpop.permute.xlu0 %995
        %997 = vrot.lane.b32.xlu0 %v840, 64
        %v998 = vpop.permute.xlu0 %997
        %999 = vrot.lane.b32.xlu0 %v841, 64
        %v1000 = vpop.permute.xlu0 %999
        %1001 = vrot.lane.b32.xlu0 %v842, 64
        %v1002 = vpop.permute.xlu0 %1001
        %1003 = vrot.lane.b32.xlu0 %v843, 64
        %v1004 = vpop.permute.xlu0 %1003
        %1005 = vrot.lane.b32.xlu0 %v844, 64
        %v1006 = vpop.permute.xlu0 %1005
        %1007 = vrot.lane.b32.xlu0 %v919, 64
        %v1008 = vpop.permute.xlu0 %1007
        %1009 = vrot.lane.b32.xlu0 %v994, 64
        %v1010 = vpop.permute.xlu0 %1009
        %v1011 = vadd.f32 %v986, %v996
        %v1012 = vadd.f32 %v987, %v998
        %v1013 = vadd.f32 %v988, %v1000
        %v1014 = vadd.f32 %v989, %v1002
        %v1015 = vadd.f32 %v990, %v1004
        %v1016 = vadd.f32 %v991, %v1006
        %v1017 = vadd.f32 %v992, %v1008
        %v1018 = vadd.f32 %v993, %v1010
        %v1019 = vmul.f32 %v1011, %v248
        %v1020 = vmul.f32 %v1012, %v249
        %v1021 = vmul.f32 %v1013, %v250
        %v1022 = vmul.f32 %v1014, %v251
        %v1023 = vmul.f32 %v1015, %v252
        %v1024 = vmul.f32 %v1016, %v253
        %v1025 = vmul.f32 %v1017, %v254
        %v1026 = vmul.f32 %v1018, %v255
        %v1027 = vpack.c.bf16 %v1020, %v1019
        %v1028 = vpack.c.bf16 %v1022, %v1021
        %v1029 = vpack.c.bf16 %v1024, %v1023
        %v1030 = vpack.c.bf16 %v1026, %v1025
        %s1031 = scalar_lea.vmem [#allocation3], 64
        %v1032 = vld [vmem:[%s1031] sm:$0xf]
        %v1033 = vld [vmem:[%s1031 + $0x4] sm:$0xf]
        %v1034 = vld [vmem:[%s1031 + $0x8] sm:$0xf]
        %v1035 = vld [vmem:[%s1031 + $0xc] sm:$0xf]
        %v1036 = vld [vmem:[%s1031 + $0x10] sm:$0xf]
        %v1037 = vld [vmem:[%s1031 + $0x14] sm:$0xf]
        %v1038 = vld [vmem:[%s1031 + $0x18] sm:$0xf]
        %v1039 = vld [vmem:[%s1031 + $0x1c] sm:$0xf]
        %v1040 = vld [vmem:[%s1031 + $0x20] sm:$0xf]
        %v1041 = vld [vmem:[%s1031 + $0x24] sm:$0xf]
        %v1042 = vld [vmem:[%s1031 + $0x28] sm:$0xf]
        %v1043 = vld [vmem:[%s1031 + $0x2c] sm:$0xf]
        %v1044 = vld [vmem:[%s1031 + $0x30] sm:$0xf]
        %v1045 = vld [vmem:[%s1031 + $0x34] sm:$0xf]
        %v1046 = vld [vmem:[%s1031 + $0x38] sm:$0xf]
        %v1047 = vld [vmem:[%s1031 + $0x3c] sm:$0xf]
        %v1048 = vlaneseq
        %v1049 = vshrl.u32 %v1048, 7
        %v1050 = vsub.s32 2, %v1049
        %v1051 = vrot.slane %v246, %v1050
        %v1068 = vunpack.c.l.b16 %v1032
        %v1069 = vunpack.c.l.b16 %v1033
        %v1070 = vunpack.c.l.b16 %v1034
        %v1071 = vunpack.c.l.b16 %v1035
        %v1072 = vunpack.c.l.b16 %v1036
        %v1073 = vunpack.c.l.b16 %v1037
        %v1074 = vunpack.c.l.b16 %v1038
        %v1075 = vunpack.c.l.b16 %v1039
        %v1076 = vunpack.c.l.b16 %v1040
        %v1077 = vunpack.c.l.b16 %v1041
        %v1078 = vunpack.c.l.b16 %v1042
        %v1079 = vunpack.c.l.b16 %v1043
        %v1080 = vunpack.c.l.b16 %v1044
        %v1081 = vunpack.c.l.b16 %v1045
        %v1082 = vunpack.c.l.b16 %v1046
        %v1083 = vunpack.c.l.b16 %v1047
        %v1084 = vpack.c.b16 %v1069, %v1068
        %v1085 = vpack.c.b16 %v1071, %v1070
        %v1086 = vpack.c.b16 %v1073, %v1072
        %v1087 = vpack.c.b16 %v1075, %v1074
        %v1088 = vpack.c.b16 %v1077, %v1076
        %v1089 = vpack.c.b16 %v1079, %v1078
        %v1090 = vpack.c.b16 %v1081, %v1080
        %v1091 = vpack.c.b16 %v1083, %v1082
        %1100 = vmatprep.subr.bf16.mxu0 0
        %1101 = vmatpush1.bf16.msra.mxu0 %v1084
        %1102 = vmatprep.subr.bf16.mxu0 0
        %1103 = vmatpush1.bf16.msra.mxu0 %v1085
        %1104 = vmatprep.subr.bf16.mxu0 0
        %1105 = vmatpush1.bf16.msra.mxu0 %v1086
        %1106 = vmatprep.subr.bf16.mxu0 0
        %1107 = vmatpush1.bf16.msra.mxu0 %v1087
        %1108 = vmatprep.subr.bf16.mxu0 0
        %1109 = vmatpush1.bf16.msra.mxu0 %v1088
        %1110 = vmatprep.subr.bf16.mxu0 0
        %1111 = vmatpush1.bf16.msra.mxu0 %v1089
        %1112 = vmatprep.subr.bf16.mxu0 0
        %1113 = vmatpush1.bf16.msra.mxu0 %v1090
        %1114 = vmatprep.subr.bf16.mxu0 0
        %1115 = vmatpush1.bf16.msra.mxu0 %v1091
        %1116 = vmatprep.subr.bf16.mxu0 0
        %1117 = vmatpush1.bf16.msra.mxu0 0
        %1118 = vmatprep.subr.bf16.mxu0 0
        %1119 = vmatpush1.bf16.msra.mxu0 0
        %1120 = vmatprep.subr.bf16.mxu0 0
        %1121 = vmatpush1.bf16.msra.mxu0 0
        %1122 = vmatprep.subr.bf16.mxu0 0
        %1123 = vmatpush1.bf16.msra.mxu0 0
        %1124 = vmatprep.subr.bf16.mxu0 0
        %1125 = vmatpush1.bf16.msra.mxu0 0
        %1126 = vmatprep.subr.bf16.mxu0 0
        %1127 = vmatpush1.bf16.msra.mxu0 0
        %1128 = vmatprep.subr.bf16.mxu0 0
        %1129 = vmatpush1.bf16.msra.mxu0 0
        %1130 = vmatprep.subr.bf16.mxu0 0
        %1131 = vmatpush1.bf16.msra.mxu0 0
        %1132 = vmatprep.mubr.bf16.mxu0 0
        %1133 = vmatmul.mubr.bf16.gmra.mrb[0].mxu0 %v1027
        %v1134 = vpop.f32.mrb[0].mxu0
        %v1135 = vadd.f32 %v1051, %v1134
        %v1136 = vpop.f32.mrb[0].mxu0
        %v1137 = vpop.f32.mrb[0].mxu0
        %v1138 = vadd.f32 %v1051, %v1137
        %v1139 = vpop.f32.mrb[0].mxu0
        %1140 = vmatprep.mubr.bf16.mxu0 0
        %1141 = vmatmul.mubr.bf16.gmra.mrb[0].mxu0 %v1028
        %v1142 = vpop.f32.mrb[0].mxu0
        %v1143 = vadd.f32 %v1051, %v1142
        %v1144 = vpop.f32.mrb[0].mxu0
        %v1145 = vpop.f32.mrb[0].mxu0
        %v1146 = vadd.f32 %v1051, %v1145
        %v1147 = vpop.f32.mrb[0].mxu0
        %1148 = vmatprep.mubr.bf16.mxu0 0
        %1149 = vmatmul.mubr.bf16.gmra.mrb[0].mxu0 %v1029
        %v1150 = vpop.f32.mrb[0].mxu0
        %v1151 = vadd.f32 %v1051, %v1150
        %v1152 = vpop.f32.mrb[0].mxu0
        %v1153 = vpop.f32.mrb[0].mxu0
        %v1154 = vadd.f32 %v1051, %v1153
        %v1155 = vpop.f32.mrb[0].mxu0
        %1156 = vmatprep.mubr.bf16.mxu0 0
        %1157 = vmatmul.mubr.bf16.gmra.mrb[0].mxu0 %v1030
        %v1158 = vpop.f32.mrb[0].mxu0
        %v1159 = vadd.f32 %v1051, %v1158
        %v1160 = vpop.f32.mrb[0].mxu0
        %v1161 = vpop.f32.mrb[0].mxu0
        %v1162 = vadd.f32 %v1051, %v1161
        %v1163 = vpop.f32.mrb[0].mxu0
        %1164 = vdwg.mxu0
        %v1165 = vadd.f32 %v1135, %v378
        %v1166 = vadd.f32 %v1138, %v379
        %v1167 = vadd.f32 %v1143, %v380
        %v1168 = vadd.f32 %v1146, %v381
        %v1169 = vadd.f32 %v1151, %v382
        %v1170 = vadd.f32 %v1154, %v383
        %v1171 = vadd.f32 %v1159, %v384
        %v1172 = vadd.f32 %v1162, %v385
        %vm1173 = vcmp.gt.f32.partialorder %v1165, 0.0
        %vm1174 = vcmp.gt.f32.partialorder %v1166, 0.0
        %vm1175 = vcmp.gt.f32.partialorder %v1167, 0.0
        %vm1176 = vcmp.gt.f32.partialorder %v1168, 0.0
        %vm1177 = vcmp.gt.f32.partialorder %v1169, 0.0
        %vm1178 = vcmp.gt.f32.partialorder %v1170, 0.0
        %vm1179 = vcmp.gt.f32.partialorder %v1171, 0.0
        %vm1180 = vcmp.gt.f32.partialorder %v1172, 0.0
        %v1181 = vlaneseq
        %v1182 = vshrl.u32 %v1181, 7
        %v1183 = vsub.s32 1, %v1182
        %v1184 = vrot.slane %v247, %v1183
        %v1185 = vmul.f32 %v1184, %v1165
        %v1186 = vmul.f32 %v1184, %v1166
        %v1187 = vmul.f32 %v1184, %v1167
        %v1188 = vmul.f32 %v1184, %v1168
        %v1189 = vmul.f32 %v1184, %v1169
        %v1190 = vmul.f32 %v1184, %v1170
        %v1191 = vmul.f32 %v1184, %v1171
        %v1192 = vmul.f32 %v1184, %v1172
        %v1193 = vsel %vm1173, %v1165, %v1185
        %v1194 = vsel %vm1174, %v1166, %v1186
        %v1195 = vsel %vm1175, %v1167, %v1187
        %v1196 = vsel %vm1176, %v1168, %v1188
        %v1197 = vsel %vm1177, %v1169, %v1189
        %v1198 = vsel %vm1178, %v1170, %v1190
        %v1199 = vsel %vm1179, %v1171, %v1191
        %v1200 = vsel %vm1180, %v1172, %v1192
        %1201 = vst [vmem:[#allocation2 + $0x10] sm:$0xff] %v1193
        %1202 = vst [vmem:[#allocation2 + $0x18] sm:$0xff] %v1194
        %1203 = vst [vmem:[#allocation2 + $0x20] sm:$0xff] %v1195
        %1204 = vst [vmem:[#allocation2 + $0x28] sm:$0xff] %v1196
        %1205 = vst [vmem:[#allocation2 + $0x30] sm:$0xff] %v1197
        %1206 = vst [vmem:[#allocation2 + $0x38] sm:$0xff] %v1198
        %1207 = vst [vmem:[#allocation2 + $0x40] sm:$0xff] %v1199
        %1208 = vst [vmem:[#allocation2 + $0x48] sm:$0xff] %v1200
        %v1209 = vld [vmem:[#allocation2 + $0x7] sm:$0xff]
        %v1210 = vld [vmem:[#allocation2 + $0xf] sm:$0xff]
        %v1211 = vld [vmem:[#allocation2 + $0x17] sm:$0xff]
        %v1212 = vld [vmem:[#allocation2 + $0x1f] sm:$0xff]
        %v1213 = vld [vmem:[#allocation2 + $0x27] sm:$0xff]
        %v1214 = vld [vmem:[#allocation2 + $0x2f] sm:$0xff]
        %v1215 = vld [vmem:[#allocation2 + $0x37] sm:$0xff]
        %v1216 = vld [vmem:[#allocation2 + $0x3f] sm:$0xff]
        %v1217 = vld [vmem:[#allocation2 + $0x8] sm:$0xff]
        %v1218 = vld [vmem:[#allocation2 + $0x10] sm:$0xff]
        %v1219 = vld [vmem:[#allocation2 + $0x18] sm:$0xff]
        %v1220 = vld [vmem:[#allocation2 + $0x20] sm:$0xff]
        %v1221 = vld [vmem:[#allocation2 + $0x28] sm:$0xff]
        %v1222 = vld [vmem:[#allocation2 + $0x30] sm:$0xff]
        %v1223 = vld [vmem:[#allocation2 + $0x38] sm:$0xff]
        %v1224 = vld [vmem:[#allocation2 + $0x40] sm:$0xff]
        %1225 = vrot.lane.b32.xlu0 %v1217, 8
        %v1226 = vpop.permute.xlu0 %1225
        %1227 = vrot.lane.b32.xlu0 %v1218, 8
        %v1228 = vpop.permute.xlu0 %1227
        %1229 = vrot.lane.b32.xlu0 %v1219, 8
        %v1230 = vpop.permute.xlu0 %1229
        %1231 = vrot.lane.b32.xlu0 %v1220, 8
        %v1232 = vpop.permute.xlu0 %1231
        %1233 = vrot.lane.b32.xlu0 %v1221, 8
        %v1234 = vpop.permute.xlu0 %1233
        %1235 = vrot.lane.b32.xlu0 %v1222, 8
        %v1236 = vpop.permute.xlu0 %1235
        %1237 = vrot.lane.b32.xlu0 %v1223, 8
        %v1238 = vpop.permute.xlu0 %1237
        %1239 = vrot.lane.b32.xlu0 %v1224, 8
        %v1240 = vpop.permute.xlu0 %1239
        %v1241 = vadd.f32 %v1209, %v1226
        %v1242 = vadd.f32 %v1210, %v1228
        %v1243 = vadd.f32 %v1211, %v1230
        %v1244 = vadd.f32 %v1212, %v1232
        %v1245 = vadd.f32 %v1213, %v1234
        %v1246 = vadd.f32 %v1214, %v1236
        %v1247 = vadd.f32 %v1215, %v1238
        %v1248 = vadd.f32 %v1216, %v1240
        %v1249 = vld [vmem:[#allocation2 + $0x9] sm:$0xff]
        %v1250 = vld [vmem:[#allocation2 + $0x11] sm:$0xff]
        %v1251 = vld [vmem:[#allocation2 + $0x19] sm:$0xff]
        %v1252 = vld [vmem:[#allocation2 + $0x21] sm:$0xff]
        %v1253 = vld [vmem:[#allocation2 + $0x29] sm:$0xff]
        %v1254 = vld [vmem:[#allocation2 + $0x31] sm:$0xff]
        %v1255 = vld [vmem:[#allocation2 + $0x39] sm:$0xff]
        %v1256 = vld [vmem:[#allocation2 + $0x41] sm:$0xff]
        %1257 = vrot.lane.b32.xlu0 %v1249, 16
        %v1258 = vpop.permute.xlu0 %1257
        %1259 = vrot.lane.b32.xlu0 %v1250, 16
        %v1260 = vpop.permute.xlu0 %1259
        %1261 = vrot.lane.b32.xlu0 %v1251, 16
        %v1262 = vpop.permute.xlu0 %1261
        %1263 = vrot.lane.b32.xlu0 %v1252, 16
        %v1264 = vpop.permute.xlu0 %1263
        %1265 = vrot.lane.b32.xlu0 %v1253, 16
        %v1266 = vpop.permute.xlu0 %1265
        %1267 = vrot.lane.b32.xlu0 %v1254, 16
        %v1268 = vpop.permute.xlu0 %1267
        %1269 = vrot.lane.b32.xlu0 %v1255, 16
        %v1270 = vpop.permute.xlu0 %1269
        %1271 = vrot.lane.b32.xlu0 %v1256, 16
        %v1272 = vpop.permute.xlu0 %1271
        %v1273 = vadd.f32 %v1241, %v1258
        %v1274 = vadd.f32 %v1242, %v1260
        %v1275 = vadd.f32 %v1243, %v1262
        %v1276 = vadd.f32 %v1244, %v1264
        %v1277 = vadd.f32 %v1245, %v1266
        %v1278 = vadd.f32 %v1246, %v1268
        %v1279 = vadd.f32 %v1247, %v1270
        %v1280 = vadd.f32 %v1248, %v1272
        %v1281 = vld [vmem:[#allocation2 + $0x47] sm:$0xff]
        %1282 = vrot.lane.b32.xlu0 %v1210, 24
        %v1283 = vpop.permute.xlu0 %1282
        %1284 = vrot.lane.b32.xlu0 %v1211, 24
        %v1285 = vpop.permute.xlu0 %1284
        %1286 = vrot.lane.b32.xlu0 %v1212, 24
        %v1287 = vpop.permute.xlu0 %1286
        %1288 = vrot.lane.b32.xlu0 %v1213, 24
        %v1289 = vpop.permute.xlu0 %1288
        %1290 = vrot.lane.b32.xlu0 %v1214, 24
        %v1291 = vpop.permute.xlu0 %1290
        %1292 = vrot.lane.b32.xlu0 %v1215, 24
        %v1293 = vpop.permute.xlu0 %1292
        %1294 = vrot.lane.b32.xlu0 %v1216, 24
        %v1295 = vpop.permute.xlu0 %1294
        %1296 = vrot.lane.b32.xlu0 %v1281, 24
        %v1297 = vpop.permute.xlu0 %1296
        %v1298 = vadd.f32 %v1273, %v1283
        %v1299 = vadd.f32 %v1274, %v1285
        %v1300 = vadd.f32 %v1275, %v1287
        %v1301 = vadd.f32 %v1276, %v1289
        %v1302 = vadd.f32 %v1277, %v1291
        %v1303 = vadd.f32 %v1278, %v1293
        %v1304 = vadd.f32 %v1279, %v1295
        %v1305 = vadd.f32 %v1280, %v1297
        %v1306 = vld [vmem:[#allocation2 + $0x48] sm:$0xff]
        %1307 = vrot.lane.b32.xlu0 %v1218, 32
        %v1308 = vpop.permute.xlu0 %1307
        %1309 = vrot.lane.b32.xlu0 %v1219, 32
        %v1310 = vpop.permute.xlu0 %1309
        %1311 = vrot.lane.b32.xlu0 %v1220, 32
        %v1312 = vpop.permute.xlu0 %1311
        %1313 = vrot.lane.b32.xlu0 %v1221, 32
        %v1314 = vpop.permute.xlu0 %1313
        %1315 = vrot.lane.b32.xlu0 %v1222, 32
        %v1316 = vpop.permute.xlu0 %1315
        %1317 = vrot.lane.b32.xlu0 %v1223, 32
        %v1318 = vpop.permute.xlu0 %1317
        %1319 = vrot.lane.b32.xlu0 %v1224, 32
        %v1320 = vpop.permute.xlu0 %1319
        %1321 = vrot.lane.b32.xlu0 %v1306, 32
        %v1322 = vpop.permute.xlu0 %1321
        %v1323 = vadd.f32 %v1298, %v1308
        %v1324 = vadd.f32 %v1299, %v1310
        %v1325 = vadd.f32 %v1300, %v1312
        %v1326 = vadd.f32 %v1301, %v1314
        %v1327 = vadd.f32 %v1302, %v1316
        %v1328 = vadd.f32 %v1303, %v1318
        %v1329 = vadd.f32 %v1304, %v1320
        %v1330 = vadd.f32 %v1305, %v1322
        %v1331 = vld [vmem:[#allocation2 + $0x49] sm:$0xff]
        %1332 = vrot.lane.b32.xlu0 %v1250, 40
        %v1333 = vpop.permute.xlu0 %1332
        %1334 = vrot.lane.b32.xlu0 %v1251, 40
        %v1335 = vpop.permute.xlu0 %1334
        %1336 = vrot.lane.b32.xlu0 %v1252, 40
        %v1337 = vpop.permute.xlu0 %1336
        %1338 = vrot.lane.b32.xlu0 %v1253, 40
        %v1339 = vpop.permute.xlu0 %1338
        %1340 = vrot.lane.b32.xlu0 %v1254, 40
        %v1341 = vpop.permute.xlu0 %1340
        %1342 = vrot.lane.b32.xlu0 %v1255, 40
        %v1343 = vpop.permute.xlu0 %1342
        %1344 = vrot.lane.b32.xlu0 %v1256, 40
        %v1345 = vpop.permute.xlu0 %1344
        %1346 = vrot.lane.b32.xlu0 %v1331, 40
        %v1347 = vpop.permute.xlu0 %1346
        %v1348 = vadd.f32 %v1323, %v1333
        %v1349 = vadd.f32 %v1324, %v1335
        %v1350 = vadd.f32 %v1325, %v1337
        %v1351 = vadd.f32 %v1326, %v1339
        %v1352 = vadd.f32 %v1327, %v1341
        %v1353 = vadd.f32 %v1328, %v1343
        %v1354 = vadd.f32 %v1329, %v1345
        %v1355 = vadd.f32 %v1330, %v1347
        %v1356 = vld [vmem:[#allocation2 + $0x4f] sm:$0xff]
        %1357 = vrot.lane.b32.xlu0 %v1211, 48
        %v1358 = vpop.permute.xlu0 %1357
        %1359 = vrot.lane.b32.xlu0 %v1212, 48
        %v1360 = vpop.permute.xlu0 %1359
        %1361 = vrot.lane.b32.xlu0 %v1213, 48
        %v1362 = vpop.permute.xlu0 %1361
        %1363 = vrot.lane.b32.xlu0 %v1214, 48
        %v1364 = vpop.permute.xlu0 %1363
        %1365 = vrot.lane.b32.xlu0 %v1215, 48
        %v1366 = vpop.permute.xlu0 %1365
        %1367 = vrot.lane.b32.xlu0 %v1216, 48
        %v1368 = vpop.permute.xlu0 %1367
        %1369 = vrot.lane.b32.xlu0 %v1281, 48
        %v1370 = vpop.permute.xlu0 %1369
        %1371 = vrot.lane.b32.xlu0 %v1356, 48
        %v1372 = vpop.permute.xlu0 %1371
        %v1373 = vadd.f32 %v1348, %v1358
        %v1374 = vadd.f32 %v1349, %v1360
        %v1375 = vadd.f32 %v1350, %v1362
        %v1376 = vadd.f32 %v1351, %v1364
        %v1377 = vadd.f32 %v1352, %v1366
        %v1378 = vadd.f32 %v1353, %v1368
        %v1379 = vadd.f32 %v1354, %v1370
        %v1380 = vadd.f32 %v1355, %v1372
        %v1381 = vld [vmem:[#allocation2 + $0x50] sm:$0xff]
        %1382 = vrot.lane.b32.xlu0 %v1219, 56
        %v1383 = vpop.permute.xlu0 %1382
        %1384 = vrot.lane.b32.xlu0 %v1220, 56
        %v1385 = vpop.permute.xlu0 %1384
        %1386 = vrot.lane.b32.xlu0 %v1221, 56
        %v1387 = vpop.permute.xlu0 %1386
        %1388 = vrot.lane.b32.xlu0 %v1222, 56
        %v1389 = vpop.permute.xlu0 %1388
        %1390 = vrot.lane.b32.xlu0 %v1223, 56
        %v1391 = vpop.permute.xlu0 %1390
        %1392 = vrot.lane.b32.xlu0 %v1224, 56
        %v1393 = vpop.permute.xlu0 %1392
        %1394 = vrot.lane.b32.xlu0 %v1306, 56
        %v1395 = vpop.permute.xlu0 %1394
        %1396 = vrot.lane.b32.xlu0 %v1381, 56
        %v1397 = vpop.permute.xlu0 %1396
        %v1398 = vadd.f32 %v1373, %v1383
        %v1399 = vadd.f32 %v1374, %v1385
        %v1400 = vadd.f32 %v1375, %v1387
        %v1401 = vadd.f32 %v1376, %v1389
        %v1402 = vadd.f32 %v1377, %v1391
        %v1403 = vadd.f32 %v1378, %v1393
        %v1404 = vadd.f32 %v1379, %v1395
        %v1405 = vadd.f32 %v1380, %v1397
        %v1406 = vld [vmem:[#allocation2 + $0x51] sm:$0xff]
        %1407 = vrot.lane.b32.xlu0 %v1251, 64
        %v1408 = vpop.permute.xlu0 %1407
        %1409 = vrot.lane.b32.xlu0 %v1252, 64
        %v1410 = vpop.permute.xlu0 %1409
        %1411 = vrot.lane.b32.xlu0 %v1253, 64
        %v1412 = vpop.permute.xlu0 %1411
        %1413 = vrot.lane.b32.xlu0 %v1254, 64
        %v1414 = vpop.permute.xlu0 %1413
        %1415 = vrot.lane.b32.xlu0 %v1255, 64
        %v1416 = vpop.permute.xlu0 %1415
        %1417 = vrot.lane.b32.xlu0 %v1256, 64
        %v1418 = vpop.permute.xlu0 %1417
        %1419 = vrot.lane.b32.xlu0 %v1331, 64
        %v1420 = vpop.permute.xlu0 %1419
        %1421 = vrot.lane.b32.xlu0 %v1406, 64
        %v1422 = vpop.permute.xlu0 %1421
        %v1423 = vadd.f32 %v1398, %v1408
        %v1424 = vadd.f32 %v1399, %v1410
        %v1425 = vadd.f32 %v1400, %v1412
        %v1426 = vadd.f32 %v1401, %v1414
        %v1427 = vadd.f32 %v1402, %v1416
        %v1428 = vadd.f32 %v1403, %v1418
        %v1429 = vadd.f32 %v1404, %v1420
        %v1430 = vadd.f32 %v1405, %v1422
        %v1431 = vmul.f32 %v1423, %v248
        %v1432 = vmul.f32 %v1424, %v249
        %v1433 = vmul.f32 %v1425, %v250
        %v1434 = vmul.f32 %v1426, %v251
        %v1435 = vmul.f32 %v1427, %v252
        %v1436 = vmul.f32 %v1428, %v253
        %v1437 = vmul.f32 %v1429, %v254
        %v1438 = vmul.f32 %v1430, %v255
        %v1439 = vpack.c.bf16 %v1432, %v1431
        %v1440 = vpack.c.bf16 %v1434, %v1433
        %v1441 = vpack.c.bf16 %v1436, %v1435
        %v1442 = vpack.c.bf16 %v1438, %v1437
        %s1443 = scalar_lea.vmem [#allocation3], 128
        %v1444 = vld [vmem:[%s1443] sm:$0xf]
        %v1445 = vld [vmem:[%s1443 + $0x4] sm:$0xf]
        %v1446 = vld [vmem:[%s1443 + $0x8] sm:$0xf]
        %v1447 = vld [vmem:[%s1443 + $0xc] sm:$0xf]
        %v1448 = vld [vmem:[%s1443 + $0x10] sm:$0xf]
        %v1449 = vld [vmem:[%s1443 + $0x14] sm:$0xf]
        %v1450 = vld [vmem:[%s1443 + $0x18] sm:$0xf]
        %v1451 = vld [vmem:[%s1443 + $0x1c] sm:$0xf]
        %v1452 = vld [vmem:[%s1443 + $0x20] sm:$0xf]
        %v1453 = vld [vmem:[%s1443 + $0x24] sm:$0xf]
        %v1454 = vld [vmem:[%s1443 + $0x28] sm:$0xf]
        %v1455 = vld [vmem:[%s1443 + $0x2c] sm:$0xf]
        %v1456 = vld [vmem:[%s1443 + $0x30] sm:$0xf]
        %v1457 = vld [vmem:[%s1443 + $0x34] sm:$0xf]
        %v1458 = vld [vmem:[%s1443 + $0x38] sm:$0xf]
        %v1459 = vld [vmem:[%s1443 + $0x3c] sm:$0xf]
        %v1460 = vlaneseq
        %v1461 = vshrl.u32 %v1460, 7
        %v1462 = vsub.s32 3, %v1461
        %v1463 = vrot.slane %v246, %v1462
        %v1480 = vunpack.c.l.b16 %v1444
        %v1481 = vunpack.c.l.b16 %v1445
        %v1482 = vunpack.c.l.b16 %v1446
        %v1483 = vunpack.c.l.b16 %v1447
        %v1484 = vunpack.c.l.b16 %v1448
        %v1485 = vunpack.c.l.b16 %v1449
        %v1486 = vunpack.c.l.b16 %v1450
        %v1487 = vunpack.c.l.b16 %v1451
        %v1488 = vunpack.c.l.b16 %v1452
        %v1489 = vunpack.c.l.b16 %v1453
        %v1490 = vunpack.c.l.b16 %v1454
        %v1491 = vunpack.c.l.b16 %v1455
        %v1492 = vunpack.c.l.b16 %v1456
        %v1493 = vunpack.c.l.b16 %v1457
        %v1494 = vunpack.c.l.b16 %v1458
        %v1495 = vunpack.c.l.b16 %v1459
        %v1496 = vpack.c.b16 %v1481, %v1480
        %v1497 = vpack.c.b16 %v1483, %v1482
        %v1498 = vpack.c.b16 %v1485, %v1484
        %v1499 = vpack.c.b16 %v1487, %v1486
        %v1500 = vpack.c.b16 %v1489, %v1488
        %v1501 = vpack.c.b16 %v1491, %v1490
        %v1502 = vpack.c.b16 %v1493, %v1492
        %v1503 = vpack.c.b16 %v1495, %v1494
        %1512 = vmatprep.subr.bf16.mxu0 0
        %1513 = vmatpush1.bf16.msra.mxu0 %v1496
        %1514 = vmatprep.subr.bf16.mxu0 0
        %1515 = vmatpush1.bf16.msra.mxu0 %v1497
        %1516 = vmatprep.subr.bf16.mxu0 0
        %1517 = vmatpush1.bf16.msra.mxu0 %v1498
        %1518 = vmatprep.subr.bf16.mxu0 0
        %1519 = vmatpush1.bf16.msra.mxu0 %v1499
        %1520 = vmatprep.subr.bf16.mxu0 0
        %1521 = vmatpush1.bf16.msra.mxu0 %v1500
        %1522 = vmatprep.subr.bf16.mxu0 0
        %1523 = vmatpush1.bf16.msra.mxu0 %v1501
        %1524 = vmatprep.subr.bf16.mxu0 0
        %1525 = vmatpush1.bf16.msra.mxu0 %v1502
        %1526 = vmatprep.subr.bf16.mxu0 0
        %1527 = vmatpush1.bf16.msra.mxu0 %v1503
        %1528 = vmatprep.subr.bf16.mxu0 0
        %1529 = vmatpush1.bf16.msra.mxu0 0
        %1530 = vmatprep.subr.bf16.mxu0 0
        %1531 = vmatpush1.bf16.msra.mxu0 0
        %1532 = vmatprep.subr.bf16.mxu0 0
        %1533 = vmatpush1.bf16.msra.mxu0 0
        %1534 = vmatprep.subr.bf16.mxu0 0
        %1535 = vmatpush1.bf16.msra.mxu0 0
        %1536 = vmatprep.subr.bf16.mxu0 0
        %1537 = vmatpush1.bf16.msra.mxu0 0
        %1538 = vmatprep.subr.bf16.mxu0 0
        %1539 = vmatpush1.bf16.msra.mxu0 0
        %1540 = vmatprep.subr.bf16.mxu0 0
        %1541 = vmatpush1.bf16.msra.mxu0 0
        %1542 = vmatprep.subr.bf16.mxu0 0
        %1543 = vmatpush1.bf16.msra.mxu0 0
        %1544 = vmatprep.mubr.bf16.mxu0 0
        %1545 = vmatmul.mubr.bf16.gmra.mrb[0].mxu0 %v1439
        %v1546 = vpop.f32.mrb[0].mxu0
        %v1547 = vadd.f32 %v1463, %v1546
        %v1548 = vpop.f32.mrb[0].mxu0
        %v1549 = vpop.f32.mrb[0].mxu0
        %v1550 = vadd.f32 %v1463, %v1549
        %v1551 = vpop.f32.mrb[0].mxu0
        %1552 = vmatprep.mubr.bf16.mxu0 0
        %1553 = vmatmul.mubr.bf16.gmra.mrb[0].mxu0 %v1440
        %v1554 = vpop.f32.mrb[0].mxu0
        %v1555 = vadd.f32 %v1463, %v1554
        %v1556 = vpop.f32.mrb[0].mxu0
        %v1557 = vpop.f32.mrb[0].mxu0
        %v1558 = vadd.f32 %v1463, %v1557
        %v1559 = vpop.f32.mrb[0].mxu0
        %1560 = vmatprep.mubr.bf16.mxu0 0
        %1561 = vmatmul.mubr.bf16.gmra.mrb[0].mxu0 %v1441
        %v1562 = vpop.f32.mrb[0].mxu0
        %v1563 = vadd.f32 %v1463, %v1562
        %v1564 = vpop.f32.mrb[0].mxu0
        %v1565 = vpop.f32.mrb[0].mxu0
        %v1566 = vadd.f32 %v1463, %v1565
        %v1567 = vpop.f32.mrb[0].mxu0
        %1568 = vmatprep.mubr.bf16.mxu0 0
        %1569 = vmatmul.mubr.bf16.gmra.mrb[0].mxu0 %v1442
        %v1570 = vpop.f32.mrb[0].mxu0
        %v1571 = vadd.f32 %v1463, %v1570
        %v1572 = vpop.f32.mrb[0].mxu0
        %v1573 = vpop.f32.mrb[0].mxu0
        %v1574 = vadd.f32 %v1463, %v1573
        %v1575 = vpop.f32.mrb[0].mxu0
        %1576 = vdwg.mxu0
        %vm1577 = vcmp.gt.f32.partialorder %v1547, 0.0
        %vm1578 = vcmp.gt.f32.partialorder %v1550, 0.0
        %vm1579 = vcmp.gt.f32.partialorder %v1555, 0.0
        %vm1580 = vcmp.gt.f32.partialorder %v1558, 0.0
        %vm1581 = vcmp.gt.f32.partialorder %v1563, 0.0
        %vm1582 = vcmp.gt.f32.partialorder %v1566, 0.0
        %vm1583 = vcmp.gt.f32.partialorder %v1571, 0.0
        %vm1584 = vcmp.gt.f32.partialorder %v1574, 0.0
        %v1585 = vlaneseq
        %v1586 = vshrl.u32 %v1585, 7
        %v1587 = vsub.s32 2, %v1586
        %v1588 = vrot.slane %v247, %v1587
        %v1589 = vmul.f32 %v1588, %v1547
        %v1590 = vmul.f32 %v1588, %v1550
        %v1591 = vmul.f32 %v1588, %v1555
        %v1592 = vmul.f32 %v1588, %v1558
        %v1593 = vmul.f32 %v1588, %v1563
        %v1594 = vmul.f32 %v1588, %v1566
        %v1595 = vmul.f32 %v1588, %v1571
        %v1596 = vmul.f32 %v1588, %v1574
        %v1597 = vsel %vm1577, %v1547, %v1589
        %v1598 = vsel %vm1578, %v1550, %v1590
        %v1599 = vsel %vm1579, %v1555, %v1591
        %v1600 = vsel %vm1580, %v1558, %v1592
        %v1601 = vsel %vm1581, %v1563, %v1593
        %v1602 = vsel %vm1582, %v1566, %v1594
        %v1603 = vsel %vm1583, %v1571, %v1595
        %v1604 = vsel %vm1584, %v1574, %v1596
        %1605 = vst [vmem:[#allocation2 + $0x10] sm:$0xff] %v1597
        %1606 = vst [vmem:[#allocation2 + $0x18] sm:$0xff] %v1598
        %1607 = vst [vmem:[#allocation2 + $0x20] sm:$0xff] %v1599
        %1608 = vst [vmem:[#allocation2 + $0x28] sm:$0xff] %v1600
        %1609 = vst [vmem:[#allocation2 + $0x30] sm:$0xff] %v1601
        %1610 = vst [vmem:[#allocation2 + $0x38] sm:$0xff] %v1602
        %1611 = vst [vmem:[#allocation2 + $0x40] sm:$0xff] %v1603
        %1612 = vst [vmem:[#allocation2 + $0x48] sm:$0xff] %v1604
        %v1613 = vld [vmem:[#allocation2 + $0x7] sm:$0xff]
        %v1614 = vld [vmem:[#allocation2 + $0xf] sm:$0xff]
        %v1615 = vld [vmem:[#allocation2 + $0x17] sm:$0xff]
        %v1616 = vld [vmem:[#allocation2 + $0x1f] sm:$0xff]
        %v1617 = vld [vmem:[#allocation2 + $0x27] sm:$0xff]
        %v1618 = vld [vmem:[#allocation2 + $0x2f] sm:$0xff]
        %v1619 = vld [vmem:[#allocation2 + $0x37] sm:$0xff]
        %v1620 = vld [vmem:[#allocation2 + $0x3f] sm:$0xff]
        %v1621 = vld [vmem:[#allocation2 + $0x8] sm:$0xff]
        %v1622 = vld [vmem:[#allocation2 + $0x10] sm:$0xff]
        %v1623 = vld [vmem:[#allocation2 + $0x18] sm:$0xff]
        %v1624 = vld [vmem:[#allocation2 + $0x20] sm:$0xff]
        %v1625 = vld [vmem:[#allocation2 + $0x28] sm:$0xff]
        %v1626 = vld [vmem:[#allocation2 + $0x30] sm:$0xff]
        %v1627 = vld [vmem:[#allocation2 + $0x38] sm:$0xff]
        %v1628 = vld [vmem:[#allocation2 + $0x40] sm:$0xff]
        %1629 = vrot.lane.b32.xlu0 %v1621, 8
        %v1630 = vpop.permute.xlu0 %1629
        %1631 = vrot.lane.b32.xlu0 %v1622, 8
        %v1632 = vpop.permute.xlu0 %1631
        %1633 = vrot.lane.b32.xlu0 %v1623, 8
        %v1634 = vpop.permute.xlu0 %1633
        %1635 = vrot.lane.b32.xlu0 %v1624, 8
        %v1636 = vpop.permute.xlu0 %1635
        %1637 = vrot.lane.b32.xlu0 %v1625, 8
        %v1638 = vpop.permute.xlu0 %1637
        %1639 = vrot.lane.b32.xlu0 %v1626, 8
        %v1640 = vpop.permute.xlu0 %1639
        %1641 = vrot.lane.b32.xlu0 %v1627, 8
        %v1642 = vpop.permute.xlu0 %1641
        %1643 = vrot.lane.b32.xlu0 %v1628, 8
        %v1644 = vpop.permute.xlu0 %1643
        %v1645 = vadd.f32 %v1613, %v1630
        %v1646 = vadd.f32 %v1614, %v1632
        %v1647 = vadd.f32 %v1615, %v1634
        %v1648 = vadd.f32 %v1616, %v1636
        %v1649 = vadd.f32 %v1617, %v1638
        %v1650 = vadd.f32 %v1618, %v1640
        %v1651 = vadd.f32 %v1619, %v1642
        %v1652 = vadd.f32 %v1620, %v1644
        %v1653 = vld [vmem:[#allocation2 + $0x9] sm:$0xff]
        %v1654 = vld [vmem:[#allocation2 + $0x11] sm:$0xff]
        %v1655 = vld [vmem:[#allocation2 + $0x19] sm:$0xff]
        %v1656 = vld [vmem:[#allocation2 + $0x21] sm:$0xff]
        %v1657 = vld [vmem:[#allocation2 + $0x29] sm:$0xff]
        %v1658 = vld [vmem:[#allocation2 + $0x31] sm:$0xff]
        %v1659 = vld [vmem:[#allocation2 + $0x39] sm:$0xff]
        %v1660 = vld [vmem:[#allocation2 + $0x41] sm:$0xff]
        %1661 = vrot.lane.b32.xlu0 %v1653, 16
        %v1662 = vpop.permute.xlu0 %1661
        %1663 = vrot.lane.b32.xlu0 %v1654, 16
        %v1664 = vpop.permute.xlu0 %1663
        %1665 = vrot.lane.b32.xlu0 %v1655, 16
        %v1666 = vpop.permute.xlu0 %1665
        %1667 = vrot.lane.b32.xlu0 %v1656, 16
        %v1668 = vpop.permute.xlu0 %1667
        %1669 = vrot.lane.b32.xlu0 %v1657, 16
        %v1670 = vpop.permute.xlu0 %1669
        %1671 = vrot.lane.b32.xlu0 %v1658, 16
        %v1672 = vpop.permute.xlu0 %1671
        %1673 = vrot.lane.b32.xlu0 %v1659, 16
        %v1674 = vpop.permute.xlu0 %1673
        %1675 = vrot.lane.b32.xlu0 %v1660, 16
        %v1676 = vpop.permute.xlu0 %1675
        %v1677 = vadd.f32 %v1645, %v1662
        %v1678 = vadd.f32 %v1646, %v1664
        %v1679 = vadd.f32 %v1647, %v1666
        %v1680 = vadd.f32 %v1648, %v1668
        %v1681 = vadd.f32 %v1649, %v1670
        %v1682 = vadd.f32 %v1650, %v1672
        %v1683 = vadd.f32 %v1651, %v1674
        %v1684 = vadd.f32 %v1652, %v1676
        %v1685 = vld [vmem:[#allocation2 + $0x47] sm:$0xff]
        %1686 = vrot.lane.b32.xlu0 %v1614, 24
        %v1687 = vpop.permute.xlu0 %1686
        %1688 = vrot.lane.b32.xlu0 %v1615, 24
        %v1689 = vpop.permute.xlu0 %1688
        %1690 = vrot.lane.b32.xlu0 %v1616, 24
        %v1691 = vpop.permute.xlu0 %1690
        %1692 = vrot.lane.b32.xlu0 %v1617, 24
        %v1693 = vpop.permute.xlu0 %1692
        %1694 = vrot.lane.b32.xlu0 %v1618, 24
        %v1695 = vpop.permute.xlu0 %1694
        %1696 = vrot.lane.b32.xlu0 %v1619, 24
        %v1697 = vpop.permute.xlu0 %1696
        %1698 = vrot.lane.b32.xlu0 %v1620, 24
        %v1699 = vpop.permute.xlu0 %1698
        %1700 = vrot.lane.b32.xlu0 %v1685, 24
        %v1701 = vpop.permute.xlu0 %1700
        %v1702 = vadd.f32 %v1677, %v1687
        %v1703 = vadd.f32 %v1678, %v1689
        %v1704 = vadd.f32 %v1679, %v1691
        %v1705 = vadd.f32 %v1680, %v1693
        %v1706 = vadd.f32 %v1681, %v1695
        %v1707 = vadd.f32 %v1682, %v1697
        %v1708 = vadd.f32 %v1683, %v1699
        %v1709 = vadd.f32 %v1684, %v1701
        %v1710 = vld [vmem:[#allocation2 + $0x48] sm:$0xff]
        %1711 = vrot.lane.b32.xlu0 %v1622, 32
        %v1712 = vpop.permute.xlu0 %1711
        %1713 = vrot.lane.b32.xlu0 %v1623, 32
        %v1714 = vpop.permute.xlu0 %1713
        %1715 = vrot.lane.b32.xlu0 %v1624, 32
        %v1716 = vpop.permute.xlu0 %1715
        %1717 = vrot.lane.b32.xlu0 %v1625, 32
        %v1718 = vpop.permute.xlu0 %1717
        %1719 = vrot.lane.b32.xlu0 %v1626, 32
        %v1720 = vpop.permute.xlu0 %1719
        %1721 = vrot.lane.b32.xlu0 %v1627, 32
        %v1722 = vpop.permute.xlu0 %1721
        %1723 = vrot.lane.b32.xlu0 %v1628, 32
        %v1724 = vpop.permute.xlu0 %1723
        %1725 = vrot.lane.b32.xlu0 %v1710, 32
        %v1726 = vpop.permute.xlu0 %1725
        %v1727 = vadd.f32 %v1702, %v1712
        %v1728 = vadd.f32 %v1703, %v1714
        %v1729 = vadd.f32 %v1704, %v1716
        %v1730 = vadd.f32 %v1705, %v1718
        %v1731 = vadd.f32 %v1706, %v1720
        %v1732 = vadd.f32 %v1707, %v1722
        %v1733 = vadd.f32 %v1708, %v1724
        %v1734 = vadd.f32 %v1709, %v1726
        %v1735 = vld [vmem:[#allocation2 + $0x49] sm:$0xff]
        %1736 = vrot.lane.b32.xlu0 %v1654, 40
        %v1737 = vpop.permute.xlu0 %1736
        %1738 = vrot.lane.b32.xlu0 %v1655, 40
        %v1739 = vpop.permute.xlu0 %1738
        %1740 = vrot.lane.b32.xlu0 %v1656, 40
        %v1741 = vpop.permute.xlu0 %1740
        %1742 = vrot.lane.b32.xlu0 %v1657, 40
        %v1743 = vpop.permute.xlu0 %1742
        %1744 = vrot.lane.b32.xlu0 %v1658, 40
        %v1745 = vpop.permute.xlu0 %1744
        %1746 = vrot.lane.b32.xlu0 %v1659, 40
        %v1747 = vpop.permute.xlu0 %1746
        %1748 = vrot.lane.b32.xlu0 %v1660, 40
        %v1749 = vpop.permute.xlu0 %1748
        %1750 = vrot.lane.b32.xlu0 %v1735, 40
        %v1751 = vpop.permute.xlu0 %1750
        %v1752 = vadd.f32 %v1727, %v1737
        %v1753 = vadd.f32 %v1728, %v1739
        %v1754 = vadd.f32 %v1729, %v1741
        %v1755 = vadd.f32 %v1730, %v1743
        %v1756 = vadd.f32 %v1731, %v1745
        %v1757 = vadd.f32 %v1732, %v1747
        %v1758 = vadd.f32 %v1733, %v1749
        %v1759 = vadd.f32 %v1734, %v1751
        %v1760 = vld [vmem:[#allocation2 + $0x4f] sm:$0xff]
        %1761 = vrot.lane.b32.xlu0 %v1615, 48
        %v1762 = vpop.permute.xlu0 %1761
        %1763 = vrot.lane.b32.xlu0 %v1616, 48
        %v1764 = vpop.permute.xlu0 %1763
        %1765 = vrot.lane.b32.xlu0 %v1617, 48
        %v1766 = vpop.permute.xlu0 %1765
        %1767 = vrot.lane.b32.xlu0 %v1618, 48
        %v1768 = vpop.permute.xlu0 %1767
        %1769 = vrot.lane.b32.xlu0 %v1619, 48
        %v1770 = vpop.permute.xlu0 %1769
        %1771 = vrot.lane.b32.xlu0 %v1620, 48
        %v1772 = vpop.permute.xlu0 %1771
        %1773 = vrot.lane.b32.xlu0 %v1685, 48
        %v1774 = vpop.permute.xlu0 %1773
        %1775 = vrot.lane.b32.xlu0 %v1760, 48
        %v1776 = vpop.permute.xlu0 %1775
        %v1777 = vadd.f32 %v1752, %v1762
        %v1778 = vadd.f32 %v1753, %v1764
        %v1779 = vadd.f32 %v1754, %v1766
        %v1780 = vadd.f32 %v1755, %v1768
        %v1781 = vadd.f32 %v1756, %v1770
        %v1782 = vadd.f32 %v1757, %v1772
        %v1783 = vadd.f32 %v1758, %v1774
        %v1784 = vadd.f32 %v1759, %v1776
        %v1785 = vld [vmem:[#allocation2 + $0x50] sm:$0xff]
        %1786 = vrot.lane.b32.xlu0 %v1623, 56
        %v1787 = vpop.permute.xlu0 %1786
        %1788 = vrot.lane.b32.xlu0 %v1624, 56
        %v1789 = vpop.permute.xlu0 %1788
        %1790 = vrot.lane.b32.xlu0 %v1625, 56
        %v1791 = vpop.permute.xlu0 %1790
        %1792 = vrot.lane.b32.xlu0 %v1626, 56
        %v1793 = vpop.permute.xlu0 %1792
        %1794 = vrot.lane.b32.xlu0 %v1627, 56
        %v1795 = vpop.permute.xlu0 %1794
        %1796 = vrot.lane.b32.xlu0 %v1628, 56
        %v1797 = vpop.permute.xlu0 %1796
        %1798 = vrot.lane.b32.xlu0 %v1710, 56
        %v1799 = vpop.permute.xlu0 %1798
        %1800 = vrot.lane.b32.xlu0 %v1785, 56
        %v1801 = vpop.permute.xlu0 %1800
        %v1802 = vadd.f32 %v1777, %v1787
        %v1803 = vadd.f32 %v1778, %v1789
        %v1804 = vadd.f32 %v1779, %v1791
        %v1805 = vadd.f32 %v1780, %v1793
        %v1806 = vadd.f32 %v1781, %v1795
        %v1807 = vadd.f32 %v1782, %v1797
        %v1808 = vadd.f32 %v1783, %v1799
        %v1809 = vadd.f32 %v1784, %v1801
        %v1810 = vld [vmem:[#allocation2 + $0x51] sm:$0xff]
        %1811 = vrot.lane.b32.xlu0 %v1655, 64
        %v1812 = vpop.permute.xlu0 %1811
        %1813 = vrot.lane.b32.xlu0 %v1656, 64
        %v1814 = vpop.permute.xlu0 %1813
        %1815 = vrot.lane.b32.xlu0 %v1657, 64
        %v1816 = vpop.permute.xlu0 %1815
        %1817 = vrot.lane.b32.xlu0 %v1658, 64
        %v1818 = vpop.permute.xlu0 %1817
        %1819 = vrot.lane.b32.xlu0 %v1659, 64
        %v1820 = vpop.permute.xlu0 %1819
        %1821 = vrot.lane.b32.xlu0 %v1660, 64
        %v1822 = vpop.permute.xlu0 %1821
        %1823 = vrot.lane.b32.xlu0 %v1735, 64
        %v1824 = vpop.permute.xlu0 %1823
        %1825 = vrot.lane.b32.xlu0 %v1810, 64
        %v1826 = vpop.permute.xlu0 %1825
        %v1827 = vadd.f32 %v1802, %v1812
        %v1828 = vadd.f32 %v1803, %v1814
        %v1829 = vadd.f32 %v1804, %v1816
        %v1830 = vadd.f32 %v1805, %v1818
        %v1831 = vadd.f32 %v1806, %v1820
        %v1832 = vadd.f32 %v1807, %v1822
        %v1833 = vadd.f32 %v1808, %v1824
        %v1834 = vadd.f32 %v1809, %v1826
        %v1835 = vmul.f32 %v1827, %v248
        %v1836 = vmul.f32 %v1828, %v249
        %v1837 = vmul.f32 %v1829, %v250
        %v1838 = vmul.f32 %v1830, %v251
        %v1839 = vmul.f32 %v1831, %v252
        %v1840 = vmul.f32 %v1832, %v253
        %v1841 = vmul.f32 %v1833, %v254
        %v1842 = vmul.f32 %v1834, %v255
        %v1843 = vpack.c.bf16 %v1836, %v1835
        %v1844 = vpack.c.bf16 %v1838, %v1837
        %v1845 = vpack.c.bf16 %v1840, %v1839
        %v1846 = vpack.c.bf16 %v1842, %v1841
        %s1847 = scalar_lea.vmem [#allocation3], 192
        %v1848 = vld [vmem:[%s1847] sm:$0xf]
        %v1849 = vld [vmem:[%s1847 + $0x4] sm:$0xf]
        %v1850 = vld [vmem:[%s1847 + $0x8] sm:$0xf]
        %v1851 = vld [vmem:[%s1847 + $0xc] sm:$0xf]
        %v1852 = vld [vmem:[%s1847 + $0x10] sm:$0xf]
        %v1853 = vld [vmem:[%s1847 + $0x14] sm:$0xf]
        %v1854 = vld [vmem:[%s1847 + $0x18] sm:$0xf]
        %v1855 = vld [vmem:[%s1847 + $0x1c] sm:$0xf]
        %v1856 = vld [vmem:[%s1847 + $0x20] sm:$0xf]
        %v1857 = vld [vmem:[%s1847 + $0x24] sm:$0xf]
        %v1858 = vld [vmem:[%s1847 + $0x28] sm:$0xf]
        %v1859 = vld [vmem:[%s1847 + $0x2c] sm:$0xf]
        %v1860 = vld [vmem:[%s1847 + $0x30] sm:$0xf]
        %v1861 = vld [vmem:[%s1847 + $0x34] sm:$0xf]
        %v1862 = vld [vmem:[%s1847 + $0x38] sm:$0xf]
        %v1863 = vld [vmem:[%s1847 + $0x3c] sm:$0xf]
        %v1864 = vlaneseq
        %v1865 = vshrl.u32 %v1864, 7
        %v1866 = vsub.s32 4, %v1865
        %v1867 = vrot.slane %v246, %v1866
        %v1884 = vunpack.c.l.b16 %v1848
        %v1885 = vunpack.c.l.b16 %v1849
        %v1886 = vunpack.c.l.b16 %v1850
        %v1887 = vunpack.c.l.b16 %v1851
        %v1888 = vunpack.c.l.b16 %v1852
        %v1889 = vunpack.c.l.b16 %v1853
        %v1890 = vunpack.c.l.b16 %v1854
        %v1891 = vunpack.c.l.b16 %v1855
        %v1892 = vunpack.c.l.b16 %v1856
        %v1893 = vunpack.c.l.b16 %v1857
        %v1894 = vunpack.c.l.b16 %v1858
        %v1895 = vunpack.c.l.b16 %v1859
        %v1896 = vunpack.c.l.b16 %v1860
        %v1897 = vunpack.c.l.b16 %v1861
        %v1898 = vunpack.c.l.b16 %v1862
        %v1899 = vunpack.c.l.b16 %v1863
        %v1900 = vpack.c.b16 %v1885, %v1884
        %v1901 = vpack.c.b16 %v1887, %v1886
        %v1902 = vpack.c.b16 %v1889, %v1888
        %v1903 = vpack.c.b16 %v1891, %v1890
        %v1904 = vpack.c.b16 %v1893, %v1892
        %v1905 = vpack.c.b16 %v1895, %v1894
        %v1906 = vpack.c.b16 %v1897, %v1896
        %v1907 = vpack.c.b16 %v1899, %v1898
        %1916 = vmatprep.subr.bf16.mxu0 0
        %1917 = vmatpush1.bf16.msra.mxu0 %v1900
        %1918 = vmatprep.subr.bf16.mxu0 0
        %1919 = vmatpush1.bf16.msra.mxu0 %v1901
        %1920 = vmatprep.subr.bf16.mxu0 0
        %1921 = vmatpush1.bf16.msra.mxu0 %v1902
        %1922 = vmatprep.subr.bf16.mxu0 0
        %1923 = vmatpush1.bf16.msra.mxu0 %v1903
        %1924 = vmatprep.subr.bf16.mxu0 0
        %1925 = vmatpush1.bf16.msra.mxu0 %v1904
        %1926 = vmatprep.subr.bf16.mxu0 0
        %1927 = vmatpush1.bf16.msra.mxu0 %v1905
        %1928 = vmatprep.subr.bf16.mxu0 0
        %1929 = vmatpush1.bf16.msra.mxu0 %v1906
        %1930 = vmatprep.subr.bf16.mxu0 0
        %1931 = vmatpush1.bf16.msra.mxu0 %v1907
        %1932 = vmatprep.subr.bf16.mxu0 0
        %1933 = vmatpush1.bf16.msra.mxu0 0
        %1934 = vmatprep.subr.bf16.mxu0 0
        %1935 = vmatpush1.bf16.msra.mxu0 0
        %1936 = vmatprep.subr.bf16.mxu0 0
        %1937 = vmatpush1.bf16.msra.mxu0 0
        %1938 = vmatprep.subr.bf16.mxu0 0
        %1939 = vmatpush1.bf16.msra.mxu0 0
        %1940 = vmatprep.subr.bf16.mxu0 0
        %1941 = vmatpush1.bf16.msra.mxu0 0
        %1942 = vmatprep.subr.bf16.mxu0 0
        %1943 = vmatpush1.bf16.msra.mxu0 0
        %1944 = vmatprep.subr.bf16.mxu0 0
        %1945 = vmatpush1.bf16.msra.mxu0 0
        %1946 = vmatprep.subr.bf16.mxu0 0
        %1947 = vmatpush1.bf16.msra.mxu0 0
        %1948 = vmatprep.mubr.bf16.mxu0 0
        %1949 = vmatmul.mubr.bf16.gmra.mrb[0].mxu0 %v1843
        %v1950 = vpop.f32.mrb[0].mxu0
        %v1951 = vadd.f32 %v1867, %v1950
        %v1952 = vpop.f32.mrb[0].mxu0
        %v1953 = vpop.f32.mrb[0].mxu0
        %v1954 = vadd.f32 %v1867, %v1953
        %v1955 = vpop.f32.mrb[0].mxu0
        %1956 = vmatprep.mubr.bf16.mxu0 0
        %1957 = vmatmul.mubr.bf16.gmra.mrb[0].mxu0 %v1844
        %v1958 = vpop.f32.mrb[0].mxu0
        %v1959 = vadd.f32 %v1867, %v1958
        %v1960 = vpop.f32.mrb[0].mxu0
        %v1961 = vpop.f32.mrb[0].mxu0
        %v1962 = vadd.f32 %v1867, %v1961
        %v1963 = vpop.f32.mrb[0].mxu0
        %1964 = vmatprep.mubr.bf16.mxu0 0
        %1965 = vmatmul.mubr.bf16.gmra.mrb[0].mxu0 %v1845
        %v1966 = vpop.f32.mrb[0].mxu0
        %v1967 = vadd.f32 %v1867, %v1966
        %v1968 = vpop.f32.mrb[0].mxu0
        %v1969 = vpop.f32.mrb[0].mxu0
        %v1970 = vadd.f32 %v1867, %v1969
        %v1971 = vpop.f32.mrb[0].mxu0
        %1972 = vmatprep.mubr.bf16.mxu0 0
        %1973 = vmatmul.mubr.bf16.gmra.mrb[0].mxu0 %v1846
        %v1974 = vpop.f32.mrb[0].mxu0
        %v1975 = vadd.f32 %v1867, %v1974
        %v1976 = vpop.f32.mrb[0].mxu0
        %v1977 = vpop.f32.mrb[0].mxu0
        %v1978 = vadd.f32 %v1867, %v1977
        %v1979 = vpop.f32.mrb[0].mxu0
        %1980 = vdwg.mxu0
        %v1981 = vadd.f32 %v1951, %v1193
        %v1982 = vadd.f32 %v1954, %v1194
        %v1983 = vadd.f32 %v1959, %v1195
        %v1984 = vadd.f32 %v1962, %v1196
        %v1985 = vadd.f32 %v1967, %v1197
        %v1986 = vadd.f32 %v1970, %v1198
        %v1987 = vadd.f32 %v1975, %v1199
        %v1988 = vadd.f32 %v1978, %v1200
        %vm1989 = vcmp.gt.f32.partialorder %v1981, 0.0
        %vm1990 = vcmp.gt.f32.partialorder %v1982, 0.0
        %vm1991 = vcmp.gt.f32.partialorder %v1983, 0.0
        %vm1992 = vcmp.gt.f32.partialorder %v1984, 0.0
        %vm1993 = vcmp.gt.f32.partialorder %v1985, 0.0
        %vm1994 = vcmp.gt.f32.partialorder %v1986, 0.0
        %vm1995 = vcmp.gt.f32.partialorder %v1987, 0.0
        %vm1996 = vcmp.gt.f32.partialorder %v1988, 0.0
        %v1997 = vlaneseq
        %v1998 = vshrl.u32 %v1997, 7
        %v1999 = vsub.s32 3, %v1998
        %v2000 = vrot.slane %v247, %v1999
        %v2001 = vmul.f32 %v2000, %v1981
        %v2002 = vmul.f32 %v2000, %v1982
        %v2003 = vmul.f32 %v2000, %v1983
        %v2004 = vmul.f32 %v2000, %v1984
        %v2005 = vmul.f32 %v2000, %v1985
        %v2006 = vmul.f32 %v2000, %v1986
        %v2007 = vmul.f32 %v2000, %v1987
        %v2008 = vmul.f32 %v2000, %v1988
        %v2009 = vsel %vm1989, %v1981, %v2001
        %v2010 = vsel %vm1990, %v1982, %v2002
        %v2011 = vsel %vm1991, %v1983, %v2003
        %v2012 = vsel %vm1992, %v1984, %v2004
        %v2013 = vsel %vm1993, %v1985, %v2005
        %v2014 = vsel %vm1994, %v1986, %v2006
        %v2015 = vsel %vm1995, %v1987, %v2007
        %v2016 = vsel %vm1996, %v1988, %v2008
        %v2017 = vlaneseq
        %v2018 = vshrl.u32 %v2017, 7
        %v2019 = vsub.s32 4, %v2018
        %v2020 = vrot.slane %v247, %v2019
        %v2021 = vmul.f32 %v2009, %v2020
        %v2022 = vmul.f32 %v2010, %v2020
        %v2023 = vmul.f32 %v2011, %v2020
        %v2024 = vmul.f32 %v2012, %v2020
        %v2025 = vmul.f32 %v2013, %v2020
        %v2026 = vmul.f32 %v2014, %v2020
        %v2027 = vmul.f32 %v2015, %v2020
        %v2028 = vmul.f32 %v2016, %v2020
        %2029 = vadd.xlane.f32.xlu0 %v2021
        %v2030 = vpop.xlane.xlu0 %2029
        %2031 = vadd.xlane.f32.xlu0 %v2022
        %v2032 = vpop.xlane.xlu0 %2031
        %2033 = vadd.xlane.f32.xlu0 %v2023
        %v2034 = vpop.xlane.xlu0 %2033
        %2035 = vadd.xlane.f32.xlu0 %v2024
        %v2036 = vpop.xlane.xlu0 %2035
        %2037 = vadd.xlane.f32.xlu0 %v2025
        %v2038 = vpop.xlane.xlu0 %2037
        %2039 = vadd.xlane.f32.xlu0 %v2026
        %v2040 = vpop.xlane.xlu0 %2039
        %2041 = vadd.xlane.f32.xlu0 %v2027
        %v2042 = vpop.xlane.xlu0 %2041
        %2043 = vadd.xlane.f32.xlu0 %v2028
        %v2044 = vpop.xlane.xlu0 %2043
        %v2045 = vmul.f32 %v2030, 0.125
        %v2046 = vmul.f32 %v2032, 0.125
        %v2047 = vmul.f32 %v2034, 0.125
        %v2048 = vmul.f32 %v2036, 0.125
        %v2049 = vmul.f32 %v2038, 0.125
        %v2050 = vmul.f32 %v2040, 0.125
        %v2051 = vmul.f32 %v2042, 0.125
        %v2052 = vmul.f32 %v2044, 0.125
        %v2053 = vsub.f32 %v2009, %v2045
        %v2054 = vsub.f32 %v2010, %v2046
        %v2055 = vsub.f32 %v2011, %v2047
        %v2056 = vsub.f32 %v2012, %v2048
        %v2057 = vsub.f32 %v2013, %v2049
        %v2058 = vsub.f32 %v2014, %v2050
        %v2059 = vsub.f32 %v2015, %v2051
        %v2060 = vsub.f32 %v2016, %v2052
        %v2061 = vmul.f32 %v2053, %v2053
        %v2062 = vmul.f32 %v2054, %v2054
        %v2063 = vmul.f32 %v2055, %v2055
        %v2064 = vmul.f32 %v2056, %v2056
        %v2065 = vmul.f32 %v2057, %v2057
        %v2066 = vmul.f32 %v2058, %v2058
        %v2067 = vmul.f32 %v2059, %v2059
        %v2068 = vmul.f32 %v2060, %v2060
        %v2069 = vmul.f32 %v2061, %v2020
        %v2070 = vmul.f32 %v2062, %v2020
        %v2071 = vmul.f32 %v2063, %v2020
        %v2072 = vmul.f32 %v2064, %v2020
        %v2073 = vmul.f32 %v2065, %v2020
        %v2074 = vmul.f32 %v2066, %v2020
        %v2075 = vmul.f32 %v2067, %v2020
        %v2076 = vmul.f32 %v2068, %v2020
        %2077 = vadd.xlane.f32.xlu0 %v2069
        %v2078 = vpop.xlane.xlu0 %2077
        %2079 = vadd.xlane.f32.xlu0 %v2070
        %v2080 = vpop.xlane.xlu0 %2079
        %2081 = vadd.xlane.f32.xlu0 %v2071
        %v2082 = vpop.xlane.xlu0 %2081
        %2083 = vadd.xlane.f32.xlu0 %v2072
        %v2084 = vpop.xlane.xlu0 %2083
        %2085 = vadd.xlane.f32.xlu0 %v2073
        %v2086 = vpop.xlane.xlu0 %2085
        %2087 = vadd.xlane.f32.xlu0 %v2074
        %v2088 = vpop.xlane.xlu0 %2087
        %2089 = vadd.xlane.f32.xlu0 %v2075
        %v2090 = vpop.xlane.xlu0 %2089
        %2091 = vadd.xlane.f32.xlu0 %v2076
        %v2092 = vpop.xlane.xlu0 %2091
        %v2093 = vmul.f32 %v2078, 0.125
        %v2094 = vmul.f32 %v2080, 0.125
        %v2095 = vmul.f32 %v2082, 0.125
        %v2096 = vmul.f32 %v2084, 0.125
        %v2097 = vmul.f32 %v2086, 0.125
        %v2098 = vmul.f32 %v2088, 0.125
        %v2099 = vmul.f32 %v2090, 0.125
        %v2100 = vmul.f32 %v2092, 0.125
        %v2101 = vadd.f32 %v2093, 1e-05
        %v2102 = vadd.f32 %v2094, 1e-05
        %v2103 = vadd.f32 %v2095, 1e-05
        %v2104 = vadd.f32 %v2096, 1e-05
        %v2105 = vadd.f32 %v2097, 1e-05
        %v2106 = vadd.f32 %v2098, 1e-05
        %v2107 = vadd.f32 %v2099, 1e-05
        %v2108 = vadd.f32 %v2100, 1e-05
        %v2109 = vrsqrt.pop %v2101
        %v2110 = vrsqrt.pop %v2102
        %v2111 = vrsqrt.pop %v2103
        %v2112 = vrsqrt.pop %v2104
        %v2113 = vrsqrt.pop %v2105
        %v2114 = vrsqrt.pop %v2106
        %v2115 = vrsqrt.pop %v2107
        %v2116 = vrsqrt.pop %v2108
        %v2117 = vmul.f32 %v2053, %v2109
        %v2118 = vmul.f32 %v2054, %v2110
        %v2119 = vmul.f32 %v2055, %v2111
        %v2120 = vmul.f32 %v2056, %v2112
        %v2121 = vmul.f32 %v2057, %v2113
        %v2122 = vmul.f32 %v2058, %v2114
        %v2123 = vmul.f32 %v2059, %v2115
        %v2124 = vmul.f32 %v2060, %v2116
        %v2125 = vlaneseq
        %v2126 = vshrl.u32 %v2125, 7
        %v2127 = vsub.s32 5, %v2126
        %v2128 = vrot.slane %v246, %v2127
        %v2129 = vmul.f32 %v2117, %v2128
        %v2130 = vmul.f32 %v2118, %v2128
        %v2131 = vmul.f32 %v2119, %v2128
        %v2132 = vmul.f32 %v2120, %v2128
        %v2133 = vmul.f32 %v2121, %v2128
        %v2134 = vmul.f32 %v2122, %v2128
        %v2135 = vmul.f32 %v2123, %v2128
        %v2136 = vmul.f32 %v2124, %v2128
        %v2137 = vlaneseq
        %v2138 = vshrl.u32 %v2137, 7
        %v2139 = vsub.s32 6, %v2138
        %v2140 = vrot.slane %v246, %v2139
        %v2141 = vadd.f32 %v2129, %v2140
        %v2142 = vadd.f32 %v2130, %v2140
        %v2143 = vadd.f32 %v2131, %v2140
        %v2144 = vadd.f32 %v2132, %v2140
        %v2145 = vadd.f32 %v2133, %v2140
        %v2146 = vadd.f32 %v2134, %v2140
        %v2147 = vadd.f32 %v2135, %v2140
        %v2148 = vadd.f32 %v2136, %v2140
        %2149 = vst [vmem:[%s233] sm:$0xff] %v2141
        %2150 = vst [vmem:[%s233 + $0x8] sm:$0xff] %v2142
        %2151 = vst [vmem:[%s233 + $0x10] sm:$0xff] %v2143
        %2152 = vst [vmem:[%s233 + $0x18] sm:$0xff] %v2144
        %2153 = vst [vmem:[%s233 + $0x20] sm:$0xff] %v2145
        %2154 = vst [vmem:[%s233 + $0x28] sm:$0xff] %v2146
        %2155 = vst [vmem:[%s233 + $0x30] sm:$0xff] %v2147
        %2156 = vst [vmem:[%s233 + $0x38] sm:$0xff] %v2148
        %s2157 = sand.u32 %s138, 1
        %s2158 = scalar_lea.sflag [#allocation5], %s2157
        %s2159 = sand.u32 %s138, 1
        %s2160 = smul.addr %s2159, 64
        %s2161 = scalar_lea.vmem [#allocation6], %s2160
        // Predicated region
        $region45: #{tpu_custom_call.1} parent=39 // pred_check
          %p2162 = pneg %p148
        $region46: #{tpu_custom_call.1} parent=39 // pred_check_branch
          %2164 = sbr.rel (%p2162) target = $region48
        $region47: #{tpu_custom_call.1} parent=39 // pred_region
          %s2165 = smul.u32 8, %s20
          %s2167 = ssub.s32 1024, 1024
          %2168 = vsyncadd %s2158, %s2167
          %s2169 = smul.addr %s2165, 128
          %s2170 = scalar_lea.hbm %s5, %s2169
          %s2171 = sshll.u32 %s2161, 4
          %s2172 = int_to_ptr.vmem [resolvable:$true] %s2171
          %2177 = dma.vmem_to_hbm [thread:$0]  %s2172, 1024, %s2170, %s2158, 128, 128, 8
        $region48: #{tpu_custom_call.1} parent=39 // pred_fallthru
          _
      $region40: #{tpu_custom_call.1} parent=5 // pred_fallthru
        _
      %p2178 = scmp.le.s32.totalorder 2, %s15
      // Predicated region
      $region49: #{tpu_custom_call.1} parent=5 // pred_check
        %p2179 = pneg %p2178
      $region50: #{tpu_custom_call.1} parent=5 // pred_check_branch
        %2181 = sbr.rel (%p2179) target = $region52
      $region51: #{tpu_custom_call.1} parent=5 // pred_region
        %s2182 = ssub.s32 %s15, 2
        // Predicated region
        $region53: #{tpu_custom_call.1} parent=51 // pred_check
          %p2183 = pneg %p154
        $region54: #{tpu_custom_call.1} parent=51 // pred_check_branch
          %2185 = sbr.rel (%p2183) target = $region56
        $region55: #{tpu_custom_call.1} parent=51 // pred_region
          %s2186 = sand.u32 %s139, 1
          %s2187 = scalar_lea.sflag [#allocation5], %s2186
          %s2188 = sand.u32 %s139, 1
          %s2189 = smul.addr %s2188, 64
          %s2190 = scalar_lea.vmem [#allocation6], %s2189
          %2191 = dma.done %s2187, 1024
        $region56: #{tpu_custom_call.1} parent=51 // pred_fallthru
          _
      $region52: #{tpu_custom_call.1} parent=5 // pred_fallthru
        _
    $region6: #{tpu_custom_call.1} parent=1 // loop_footer
      %s19 = sadd.s32 1, %s15
    $region7: #{tpu_custom_call.1} parent=1 // loop_footer_branch
      %14 = sbr.rel target = $region3
    $region8: #{tpu_custom_call.1} parent=1 // loop_exit
      _
    %2192 = vsyncpa [#allocation4], 1
    %s2193 = scalar_lea.sflag [#allocation4], 1
    %2194 = vsyncpa %s2193, 1
    %2195 = vsyncpa [#allocation5], 1
    %s2196 = scalar_lea.sflag [#allocation5], 1
    %2197 = vsyncpa %s2196, 1

</llo_original>
